<compile_context>
chip_gen: v7x
topology: tpu7x:2x2x1
jax: 0.10.0
libtpu: 0.0.40
codegen_flags: <defaults>
</compile_context>

<pallas_src>
import jax
import jax.numpy as jnp
from jax.experimental import pallas as pl
from jax.experimental.pallas import tpu as pltpu

HIDDEN = 768        # BERT hidden size
FC1_OUT = 512
NUM_TAGS = 26
TAGS_CRF = 32       # padded tag width (kernel output width == CRF DP width)
CHUNK = 128         # chunk of the FC1 intermediate fused into FC2
TM_MAX = 512        # max rows (tokens) per grid step
NEG = -1.0e9        # "minus infinity" for pad tags (finite to avoid NaN)


# ----------------------------- Pallas kernel ------------------------------- #
def fused_fc_kernel(x_ref, w1_ref, b1_ref, w2_ref, b2_ref, o_ref):
    # x:  (tm, 768) f32   w1: (768, 512) bf16   b1: (1, 512) f32
    # w2: (512, 32) bf16  b2: (1, 32)   f32     o:  (tm, 32) f32
    x = x_ref[...].astype(jnp.bfloat16)              # cast in-kernel (per tile)
    acc = jnp.zeros(o_ref.shape, jnp.float32)
    # Unrolled fusion over the 512-wide FC1 intermediate: no (tm,512) staging.
    for c in range(FC1_OUT // CHUNK):
        lo = c * CHUNK
        h = jnp.dot(x, w1_ref[:, lo:lo + CHUNK],
                    preferred_element_type=jnp.float32)          # (tm, 128) f32
        h = (h + b1_ref[:, lo:lo + CHUNK]).astype(jnp.bfloat16)  # bias + bf16
        acc = acc + jnp.dot(h, w2_ref[lo:lo + CHUNK, :],
                            preferred_element_type=jnp.float32)  # (tm, 32) f32
    o_ref[...] = acc + b2_ref[...]


def fused_fc(x, w1, b1, w2p, b2p):
    """x: (M, 768) f32.  Returns (M, TAGS_CRF) f32 emissions (pad tags at NEG)."""
    M, H = x.shape
    H1 = w1.shape[1]
    Tp = w2p.shape[1]

    # Row tile: as big as TM_MAX, but aim for >= 2 grid steps so the "parallel"
    # axis can shard across both TensorCores on v7x. Ragged last block is
    # handled by Pallas (masked loads/stores) -- no jnp.pad / slice round trip.
    tm = min(TM_MAX, max(8, pl.cdiv(pl.cdiv(M, 2), 8) * 8))
    grid = (pl.cdiv(M, tm),)

    flops = 2 * M * (H * H1 + H1 * Tp)
    bytes_accessed = (M * H * 4 + H * H1 * 2 + H1 * 4
                      + H1 * Tp * 2 + Tp * 4 + M * Tp * 4)

    # Weight/bias index_maps are constant, so their blocks are DMA'd once and
    # stay resident in VMEM for the whole grid (no per-step re-fetch).
    return pl.pallas_call(
        fused_fc_kernel,
        out_shape=jax.ShapeDtypeStruct((M, Tp), jnp.float32),
        grid=grid,
        in_specs=[
            pl.BlockSpec((tm, H), lambda i: (i, 0)),
            pl.BlockSpec((H, H1), lambda i: (0, 0)),
            pl.BlockSpec((1, H1), lambda i: (0, 0)),
            pl.BlockSpec((H1, Tp), lambda i: (0, 0)),
            pl.BlockSpec((1, Tp), lambda i: (0, 0)),
        ],
        out_specs=pl.BlockSpec((tm, Tp), lambda i: (i, 0)),
        compiler_params=pltpu.CompilerParams(
            dimension_semantics=("parallel",)),
        cost_estimate=pl.CostEstimate(
            flops=flops, transcendentals=0, bytes_accessed=bytes_accessed),
    )(x, w1, b1, w2p, b2p)


# -------------------------- CRF Viterbi decode ------------------------------ #
# TODO(synk): backtracking is data-dependent per sequence; kept in plain JAX
# (lax.scan) instead of the Pallas kernel (tiny, sequential, latency-bound).
def crf_viterbi_decode(emissions, attention_mask, transitions, start_trans, end_trans):
    """emissions: (B, S, T) f32 with pad tags already at NEG;
    attention_mask: (B, S) int (mask[:, 0] must be 1, like torchcrf).
    Returns (tags: (B, S) int32, -1 past each sequence; lengths: (B,))."""
    B, S, T = emissions.shape
    mask = attention_mask.astype(bool)

    score0 = start_trans[None, :] + emissions[:, 0]                   # (B, T)
    trans_b = transitions[None, :, :]                                 # (1, T, T), hoisted

    def fwd_step(score, xs):
        emit_i, m_i = xs                                              # (B,T), (B,)
        nxt = score[:, :, None] + trans_b + emit_i[:, None, :]        # (B, T, T)
        idx = jnp.argmax(nxt, axis=1).astype(jnp.int32)               # (B, T)
        best = jnp.max(nxt, axis=1)                                   # (B, T)
        score = jnp.where(m_i[:, None], best, score)
        return score, idx

    xs = (jnp.swapaxes(emissions[:, 1:], 0, 1), jnp.swapaxes(mask[:, 1:], 0, 1))
    score, history = jax.lax.scan(fwd_step, score0, xs)               # history: (S-1, B, T)
    score = score + end_trans[None, :]

    seq_len = jnp.sum(attention_mask.astype(jnp.int32), axis=1)       # (B,)
    seq_end = seq_len - 1
    best_last = jnp.argmax(score, axis=1).astype(jnp.int32)           # (B,)

    hist_pad = jnp.concatenate(
        [history.astype(jnp.int32), jnp.zeros((1, B, T), jnp.int32)], axis=0)  # (S, B, T)

    def back_step(cur, p):
        hp = jax.lax.dynamic_index_in_dim(hist_pad, p, axis=0, keepdims=False)  # (B, T)
        from_hist = jnp.take_along_axis(hp, cur[:, None], axis=1)[:, 0]
        tag_p = jnp.where(p == seq_end, best_last, from_hist)
        out_tag = jnp.where(p > seq_end, -1, tag_p)
        carry = jnp.where(p >= seq_end, best_last, from_hist)
        return carry, out_tag

    ps = jnp.arange(S - 1, -1, -1)
    _, tags_rev = jax.lax.scan(back_step, best_last, ps)              # (S, B)
    tags = jnp.flip(tags_rev, axis=0).T                               # (B, S)
    return tags, seq_len


# ------------------------------ forward ------------------------------------- #
def model_forward(last_hidden_state, attention_mask, params):
    B, S, H = last_hidden_state.shape
    x = last_hidden_state.reshape(B * S, H)            # f32; bf16 cast is in-kernel
    emis = fused_fc(x, params["w1"], params["b1"], params["w2p"], params["b2p"])
    emissions = emis.reshape(B, S, TAGS_CRF)           # pad tags carry -1e9 bias
    return crf_viterbi_decode(emissions, attention_mask,
                              params["trans"], params["start"], params["end"])


def init_params(key):
    k1, k2, k3, k4, k5, k6, k7 = jax.random.split(key, 7)
    # PyTorch Linear default init: U(-1/sqrt(fan_in), 1/sqrt(fan_in))
    s1 = 1.0 / (HIDDEN ** 0.5)
    s2 = 1.0 / (FC1_OUT ** 0.5)
    w1 = jax.random.uniform(k1, (HIDDEN, FC1_OUT), jnp.float32, -s1, s1)
    b1 = jax.random.uniform(k2, (1, FC1_OUT), jnp.float32, -s1, s1)
    w2 = jax.random.uniform(k3, (FC1_OUT, NUM_TAGS), jnp.float32, -s2, s2)
    b2 = jax.random.uniform(k4, (1, NUM_TAGS), jnp.float32, -s2, s2)
    # pad the tag dim to 32; pad bias = NEG so pad tags can never win the argmax
    w2p = jnp.zeros((FC1_OUT, TAGS_CRF), jnp.float32).at[:, :NUM_TAGS].set(w2)
    b2p = jnp.full((1, TAGS_CRF), NEG, jnp.float32).at[:, :NUM_TAGS].set(b2)
    # torchcrf CRF init: U(-0.1, 0.1); pad to 32 tags with NEG transitions
    trans = jax.random.uniform(k5, (NUM_TAGS, NUM_TAGS), jnp.float32, -0.1, 0.1)
    start = jax.random.uniform(k6, (NUM_TAGS,), jnp.float32, -0.1, 0.1)
    end = jax.random.uniform(k7, (NUM_TAGS,), jnp.float32, -0.1, 0.1)
    trans_p = jnp.full((TAGS_CRF, TAGS_CRF), NEG, jnp.float32).at[:NUM_TAGS, :NUM_TAGS].set(trans)
    start_p = jnp.full((TAGS_CRF,), NEG, jnp.float32).at[:NUM_TAGS].set(start)
    end_p = jnp.full((TAGS_CRF,), NEG, jnp.float32).at[:NUM_TAGS].set(end)
    return dict(
        w1=w1.astype(jnp.bfloat16), b1=b1,
        w2p=w2p.astype(jnp.bfloat16), b2p=b2p,
        trans=trans_p, start=start_p, end=end_p,
    )


if __name__ == "__main__":
    key = jax.random.PRNGKey(0)
    kp, kh = jax.random.split(key)

    B, S = 2, 8
    params = init_params(kp)

    # Stand-in for pretrained(**inputs).last_hidden_state (external encoder).
    last_hidden_state = jax.random.normal(kh, (B, S, HIDDEN), jnp.float32)
    # attention_mask: sequence lengths 8 and 6 (first column must be 1, as in torchcrf)
    attention_mask = jnp.array(
        [[1, 1, 1, 1, 1, 1, 1, 1],
         [1, 1, 1, 1, 1, 1, 0, 0]], dtype=jnp.int32)

    fwd = jax.jit(model_forward)
    tags, lengths = fwd(last_hidden_state, attention_mask, params)
    jax.block_until_ready((tags, lengths))

    assert tags.shape == (B, S) and lengths.shape == (B,)
    assert bool(jnp.all(tags[0] >= 0)) and bool(jnp.all(tags[0] < NUM_TAGS))
    assert bool(jnp.all(tags[1, :6] < NUM_TAGS)) and bool(jnp.all(tags[1, 6:] == -1))
    print("KERNEL_OK")
</pallas_src>

<mosaic_0001>
module attributes {stable_mosaic.version = 11 : i64} {
  func.func @fused_fc_kernel(%arg0: i32, %arg1: memref<8x768xf32, #tpu.memory_space<vmem>>, %arg2: memref<768x512xbf16, #tpu.memory_space<vmem>>, %arg3: memref<1x512xf32, #tpu.memory_space<vmem>>, %arg4: memref<512x32xbf16, #tpu.memory_space<vmem>>, %arg5: memref<1x32xf32, #tpu.memory_space<vmem>>, %arg6: memref<8x32xf32, #tpu.memory_space<vmem>>) attributes {dimension_semantics = [#tpu.dimension_semantics<parallel>], iteration_bounds = array<i64: 2>, scalar_prefetch = 0 : i64, scratch_operands = 0 : i64, tpu.core_type = #tpu.core_type<tc>, window_params = [{transform_indices = @transform_0, window_bounds = array<i64: 8, 768>}, {pipeline_mode = #tpu.pipeline_mode<synchronous>, transform_indices = @transform_1, window_bounds = array<i64: 768, 512>}, {pipeline_mode = #tpu.pipeline_mode<synchronous>, transform_indices = @transform_2, window_bounds = array<i64: 1, 512>}, {pipeline_mode = #tpu.pipeline_mode<synchronous>, transform_indices = @transform_3, window_bounds = array<i64: 512, 32>}, {pipeline_mode = #tpu.pipeline_mode<synchronous>, transform_indices = @transform_4, window_bounds = array<i64: 1, 32>}, {transform_indices = @transform_5, window_bounds = array<i64: 8, 32>}]} {
    %c0 = arith.constant 0 : index
    %c0_0 = arith.constant 0 : index
    %0 = vector.load %arg1[%c0, %c0_0] : memref<8x768xf32, #tpu.memory_space<vmem>>, vector<8x768xf32>
    %1 = arith.truncf %0 : vector<8x768xf32> to vector<8x768xbf16>
    %cst = arith.constant 0.000000e+00 : f32
    %2 = vector.broadcast %cst : f32 to vector<8x32xf32>
    %c0_1 = arith.constant 0 : index
    %c0_2 = arith.constant 0 : index
    %3 = vector.load %arg2[%c0_1, %c0_2] : memref<768x512xbf16, #tpu.memory_space<vmem>>, vector<768x128xbf16>
    %cst_3 = arith.constant dense<0.000000e+00> : vector<8x128xf32>
    %4 = tpu.matmul %1, %3, %cst_3 {dimension_numbers = #tpu.dot_dimension_numbers<[1], [0], [0], [1], [0, 0, 1, 1], [], []>} : vector<8x768xbf16>, vector<768x128xbf16>, vector<8x128xf32> -> vector<8x128xf32>
    %c0_4 = arith.constant 0 : index
    %c0_5 = arith.constant 0 : index
    %5 = vector.load %arg3[%c0_4, %c0_5] : memref<1x512xf32, #tpu.memory_space<vmem>>, vector<1x128xf32>
    %6 = vector.broadcast %5 : vector<1x128xf32> to vector<8x128xf32>
    %7 = arith.addf %4, %6 : vector<8x128xf32>
    %8 = arith.truncf %7 : vector<8x128xf32> to vector<8x128xbf16>
    %c0_6 = arith.constant 0 : index
    %c0_7 = arith.constant 0 : index
    %9 = vector.load %arg4[%c0_6, %c0_7] : memref<512x32xbf16, #tpu.memory_space<vmem>>, vector<128x32xbf16>
    %cst_8 = arith.constant dense<0.000000e+00> : vector<8x32xf32>
    %10 = tpu.matmul %8, %9, %cst_8 {dimension_numbers = #tpu.dot_dimension_numbers<[1], [0], [0], [1], [0, 0, 1, 1], [], []>} : vector<8x128xbf16>, vector<128x32xbf16>, vector<8x32xf32> -> vector<8x32xf32>
    %11 = arith.addf %2, %10 : vector<8x32xf32>
    %c0_9 = arith.constant 0 : index
    %c128 = arith.constant 128 : index
    %12 = vector.load %arg2[%c0_9, %c128] : memref<768x512xbf16, #tpu.memory_space<vmem>>, vector<768x128xbf16>
    %cst_10 = arith.constant dense<0.000000e+00> : vector<8x128xf32>
    %13 = tpu.matmul %1, %12, %cst_10 {dimension_numbers = #tpu.dot_dimension_numbers<[1], [0], [0], [1], [0, 0, 1, 1], [], []>} : vector<8x768xbf16>, vector<768x128xbf16>, vector<8x128xf32> -> vector<8x128xf32>
    %c0_11 = arith.constant 0 : index
    %c128_12 = arith.constant 128 : index
    %14 = vector.load %arg3[%c0_11, %c128_12] : memref<1x512xf32, #tpu.memory_space<vmem>>, vector<1x128xf32>
    %15 = vector.broadcast %14 : vector<1x128xf32> to vector<8x128xf32>
    %16 = arith.addf %13, %15 : vector<8x128xf32>
    %17 = arith.truncf %16 : vector<8x128xf32> to vector<8x128xbf16>
    %c128_13 = arith.constant 128 : index
    %c0_14 = arith.constant 0 : index
    %18 = vector.load %arg4[%c128_13, %c0_14] : memref<512x32xbf16, #tpu.memory_space<vmem>>, vector<128x32xbf16>
    %cst_15 = arith.constant dense<0.000000e+00> : vector<8x32xf32>
    %19 = tpu.matmul %17, %18, %cst_15 {dimension_numbers = #tpu.dot_dimension_numbers<[1], [0], [0], [1], [0, 0, 1, 1], [], []>} : vector<8x128xbf16>, vector<128x32xbf16>, vector<8x32xf32> -> vector<8x32xf32>
    %20 = arith.addf %11, %19 : vector<8x32xf32>
    %c0_16 = arith.constant 0 : index
    %c256 = arith.constant 256 : index
    %21 = vector.load %arg2[%c0_16, %c256] : memref<768x512xbf16, #tpu.memory_space<vmem>>, vector<768x128xbf16>
    %cst_17 = arith.constant dense<0.000000e+00> : vector<8x128xf32>
    %22 = tpu.matmul %1, %21, %cst_17 {dimension_numbers = #tpu.dot_dimension_numbers<[1], [0], [0], [1], [0, 0, 1, 1], [], []>} : vector<8x768xbf16>, vector<768x128xbf16>, vector<8x128xf32> -> vector<8x128xf32>
    %c0_18 = arith.constant 0 : index
    %c256_19 = arith.constant 256 : index
    %23 = vector.load %arg3[%c0_18, %c256_19] : memref<1x512xf32, #tpu.memory_space<vmem>>, vector<1x128xf32>
    %24 = vector.broadcast %23 : vector<1x128xf32> to vector<8x128xf32>
    %25 = arith.addf %22, %24 : vector<8x128xf32>
    %26 = arith.truncf %25 : vector<8x128xf32> to vector<8x128xbf16>
    %c256_20 = arith.constant 256 : index
    %c0_21 = arith.constant 0 : index
    %27 = vector.load %arg4[%c256_20, %c0_21] : memref<512x32xbf16, #tpu.memory_space<vmem>>, vector<128x32xbf16>
    %cst_22 = arith.constant dense<0.000000e+00> : vector<8x32xf32>
    %28 = tpu.matmul %26, %27, %cst_22 {dimension_numbers = #tpu.dot_dimension_numbers<[1], [0], [0], [1], [0, 0, 1, 1], [], []>} : vector<8x128xbf16>, vector<128x32xbf16>, vector<8x32xf32> -> vector<8x32xf32>
    %29 = arith.addf %20, %28 : vector<8x32xf32>
    %c0_23 = arith.constant 0 : index
    %c384 = arith.constant 384 : index
    %30 = vector.load %arg2[%c0_23, %c384] : memref<768x512xbf16, #tpu.memory_space<vmem>>, vector<768x128xbf16>
    %cst_24 = arith.constant dense<0.000000e+00> : vector<8x128xf32>
    %31 = tpu.matmul %1, %30, %cst_24 {dimension_numbers = #tpu.dot_dimension_numbers<[1], [0], [0], [1], [0, 0, 1, 1], [], []>} : vector<8x768xbf16>, vector<768x128xbf16>, vector<8x128xf32> -> vector<8x128xf32>
    %c0_25 = arith.constant 0 : index
    %c384_26 = arith.constant 384 : index
    %32 = vector.load %arg3[%c0_25, %c384_26] : memref<1x512xf32, #tpu.memory_space<vmem>>, vector<1x128xf32>
    %33 = vector.broadcast %32 : vector<1x128xf32> to vector<8x128xf32>
    %34 = arith.addf %31, %33 : vector<8x128xf32>
    %35 = arith.truncf %34 : vector<8x128xf32> to vector<8x128xbf16>
    %c384_27 = arith.constant 384 : index
    %c0_28 = arith.constant 0 : index
    %36 = vector.load %arg4[%c384_27, %c0_28] : memref<512x32xbf16, #tpu.memory_space<vmem>>, vector<128x32xbf16>
    %cst_29 = arith.constant dense<0.000000e+00> : vector<8x32xf32>
    %37 = tpu.matmul %35, %36, %cst_29 {dimension_numbers = #tpu.dot_dimension_numbers<[1], [0], [0], [1], [0, 0, 1, 1], [], []>} : vector<8x128xbf16>, vector<128x32xbf16>, vector<8x32xf32> -> vector<8x32xf32>
    %38 = arith.addf %29, %37 : vector<8x32xf32>
    %c0_30 = arith.constant 0 : index
    %c0_31 = arith.constant 0 : index
    %39 = vector.load %arg5[%c0_30, %c0_31] : memref<1x32xf32, #tpu.memory_space<vmem>>, vector<1x32xf32>
    %40 = vector.broadcast %39 : vector<1x32xf32> to vector<8x32xf32>
    %41 = arith.addf %38, %40 : vector<8x32xf32>
    %c0_32 = arith.constant 0 : index
    %c0_33 = arith.constant 0 : index
    %42 = vector.load %arg6[%c0_32, %c0_33] : memref<8x32xf32, #tpu.memory_space<vmem>>, vector<8x32xf32>
    tpu.vector_store %arg6[%c0_32, %c0_33], %41 {strides = array<i32>} : memref<8x32xf32, #tpu.memory_space<vmem>>, vector<8x32xf32>,
    return
  }
  func.func @transform_0(%arg0: i32) -> (i32, i32) {
    %c0_i32 = arith.constant 0 : i32
    %c0_i32_0 = arith.constant 0 : i32
    return %arg0, %c0_i32 : i32, i32
  }
  func.func @transform_1(%arg0: i32) -> (i32, i32) {
    %c0_i32 = arith.constant 0 : i32
    %c0_i32_0 = arith.constant 0 : i32
    %c0_i32_1 = arith.constant 0 : i32
    return %c0_i32, %c0_i32_0 : i32, i32
  }
  func.func @transform_2(%arg0: i32) -> (i32, i32) {
    %c0_i32 = arith.constant 0 : i32
    %c0_i32_0 = arith.constant 0 : i32
    %c0_i32_1 = arith.constant 0 : i32
    return %c0_i32, %c0_i32_0 : i32, i32
  }
  func.func @transform_3(%arg0: i32) -> (i32, i32) {
    %c0_i32 = arith.constant 0 : i32
    %c0_i32_0 = arith.constant 0 : i32
    %c0_i32_1 = arith.constant 0 : i32
    return %c0_i32, %c0_i32_0 : i32, i32
  }
  func.func @transform_4(%arg0: i32) -> (i32, i32) {
    %c0_i32 = arith.constant 0 : i32
    %c0_i32_0 = arith.constant 0 : i32
    %c0_i32_1 = arith.constant 0 : i32
    return %c0_i32, %c0_i32_0 : i32, i32
  }
  func.func @transform_5(%arg0: i32) -> (i32, i32) {
    %c0_i32 = arith.constant 0 : i32
    %c0_i32_0 = arith.constant 0 : i32
    return %arg0, %c0_i32 : i32, i32
  }
}

</mosaic_0001>

<llo_original>
// kernel: custom-call.2
$region0: #{custom-call.2}
  %s0 = inlined_call_operand.vmem [shape: s32[7,2,32], index: 0, kind: output, shape index: {}]

// kernel: custom-call.3
$region0: #{custom-call.3}
  %s0 = inlined_call_operand.vmem [shape: s32[8,2], index: 0, kind: output, shape index: {}]

// kernel: model_forward.1
$region0: #{model_forward.1}
  #allocation0 [shape = 'u32[]', space=smem, size = 0x4, offset = 0x4, fixed_abs, tag = 'smem constant byte address 0x4 - core index']
  #allocation1 [shape = 'u32[144,128]{1,0:T(1,128)}', space=vmem, size = 0x12000, scoped, tag = 'internal scratch']
  %s0 = inlined_call_operand.vmem [shape: f32[16,768], index: 0, kind: input, shape index: {}]
  %s1 = inlined_call_operand.hbm [shape: bf16[768,512], index: 1, kind: input, shape index: {}]
  %s2 = inlined_call_operand.vmem [shape: f32[1,512], index: 2, kind: input, shape index: {}]
  %s3 = inlined_call_operand.vmem [shape: bf16[512,32], index: 3, kind: input, shape index: {}]
  %s4 = inlined_call_operand.vmem [shape: f32[1,32], index: 4, kind: input, shape index: {}]
  %s5 = inlined_call_operand.vmem [shape: f32[16,32], index: 5, kind: output, shape index: {}]
  %s6 = sld [smem:[#allocation0]]
  $region57: #{model_forward.1} parent=0
    _
  %s8 = ssub.s32 1, %s6
  %s9 = scalar_select 0, %s8, %s6
  $region1: #{model_forward.1} parent=0
    #allocation2 [shape = 'u8[786432]{0}', space=vmem, size = 0xc0000, scoped, tag = 'input window, operand 1, single buffered']
    #allocation3 [shape = 's32[2]{0}', space=sflag, size = 0x8, scoped, tag = 'scoped memory for model_forward.1']
    %10 = vsyncpa [#allocation3], 0
    loop: start=0, step=1, limit=4
    $region2: #{model_forward.1} parent=1 // loop_pre_header
      _
    $region3: #{model_forward.1} parent=1 // loop_header
      %s12 = sphi 0, %s16
      %p13 = scmp.ge.s32.totalorder %s12, 4
      %s22 = sphi 0, %s24
      %s25 = sphi 0, %s22
      %s26 = sphi 0, %s25
      %s42 = sphi 0, %s26
      %s46 = sphi 0, %s46
      %s48 = sphi 0, %s46
      %s49 = sphi 0, %s48
      %s63 = sphi 0, %s49
      %s67 = sphi 0, %s67
      %s69 = sphi 0, %s67
      %s70 = sphi 0, %s69
      %s84 = sphi 0, %s70
      %s88 = sphi 0, %s88
      %s90 = sphi 0, %s88
      %s91 = sphi 0, %s90
      %s105 = sphi 0, %s91
      %s109 = sphi 0, %s109
      %s111 = sphi 0, %s109
      %s112 = sphi 0, %s111
      %s126 = sphi 0, %s112
      %s132 = sphi 0, %s134
      %s135 = sphi 0, %s132
      %s136 = sphi 0, %s135
      %s152 = sphi 0, %s136
    $region4: #{model_forward.1} parent=1 // loop_header_branch
      %15 = sbr.rel (%p13) target = $region8
    $region5: #{model_forward.1} parent=1 // loop_body
      %s17 = ssub.s32 %s12, 1
      %s18 = ssub.s32 %s12, 2
      %s19 = sadd.s32 %s12, 1
      %s20 = ssub.s32 %s12, %s19
      %p21 = scmp.eq.s32.totalorder %s20, 0
      %s23 = sadd.s32 %s22, 1
      %s24 = scalar_select %p21, %s22, %s23
      %p27 = pneg %p21
      %p28 = scmp.eq.s32.totalorder %s12, 1
      %p29 = por %p27, %p28
      %p30 = scmp.ne.s32.totalorder %s22, %s25
      %p31 = scmp.eq.s32.totalorder %s12, 0
      %p32 = por %p30, %p31
      %p33 = scmp.ne.s32.totalorder %s22, %s25
      %p34 = scmp.eq.s32.totalorder %s17, 1
      %p35 = por %p33, %p34
      %p36 = scmp.ne.s32.totalorder %s25, %s26
      %p37 = scmp.eq.s32.totalorder %s17, 0
      %p38 = por %p36, %p37
      %p39 = scmp.ne.s32.totalorder %s25, %s26
      %p40 = scmp.eq.s32.totalorder %s18, 1
      %p41 = por %p39, %p40
      %p43 = scmp.ne.s32.totalorder %s26, %s42
      %p44 = scmp.eq.s32.totalorder %s18, 0
      %p45 = por %p43, %p44
      %s47 = sadd.s32 %s46, 1
      %p50 = scmp.eq.s32.totalorder %s12, 1
      %p51 = scmp.ne.s32.totalorder %s46, %s48
      %p52 = scmp.eq.s32.totalorder %s12, 0
      %p53 = por %p51, %p52
      %p54 = scmp.ne.s32.totalorder %s46, %s48
      %p55 = scmp.eq.s32.totalorder %s17, 1
      %p56 = por %p54, %p55
      %p57 = scmp.ne.s32.totalorder %s48, %s49
      %p58 = scmp.eq.s32.totalorder %s17, 0
      %p59 = por %p57, %p58
      %p60 = scmp.ne.s32.totalorder %s48, %s49
      %p61 = scmp.eq.s32.totalorder %s18, 1
      %p62 = por %p60, %p61
      %p64 = scmp.ne.s32.totalorder %s49, %s63
      %p65 = scmp.eq.s32.totalorder %s18, 0
      %p66 = por %p64, %p65
      %s68 = sadd.s32 %s67, 1
      %p71 = scmp.eq.s32.totalorder %s12, 1
      %p72 = scmp.ne.s32.totalorder %s67, %s69
      %p73 = scmp.eq.s32.totalorder %s12, 0
      %p74 = por %p72, %p73
      %p75 = scmp.ne.s32.totalorder %s67, %s69
      %p76 = scmp.eq.s32.totalorder %s17, 1
      %p77 = por %p75, %p76
      %p78 = scmp.ne.s32.totalorder %s69, %s70
      %p79 = scmp.eq.s32.totalorder %s17, 0
      %p80 = por %p78, %p79
      %p81 = scmp.ne.s32.totalorder %s69, %s70
      %p82 = scmp.eq.s32.totalorder %s18, 1
      %p83 = por %p81, %p82
      %p85 = scmp.ne.s32.totalorder %s70, %s84
      %p86 = scmp.eq.s32.totalorder %s18, 0
      %p87 = por %p85, %p86
      %s89 = sadd.s32 %s88, 1
      %p92 = scmp.eq.s32.totalorder %s12, 1
      %p93 = scmp.ne.s32.totalorder %s88, %s90
      %p94 = scmp.eq.s32.totalorder %s12, 0
      %p95 = por %p93, %p94
      %p96 = scmp.ne.s32.totalorder %s88, %s90
      %p97 = scmp.eq.s32.totalorder %s17, 1
      %p98 = por %p96, %p97
      %p99 = scmp.ne.s32.totalorder %s90, %s91
      %p100 = scmp.eq.s32.totalorder %s17, 0
      %p101 = por %p99, %p100
      %p102 = scmp.ne.s32.totalorder %s90, %s91
      %p103 = scmp.eq.s32.totalorder %s18, 1
      %p104 = por %p102, %p103
      %p106 = scmp.ne.s32.totalorder %s91, %s105
      %p107 = scmp.eq.s32.totalorder %s18, 0
      %p108 = por %p106, %p107
      %s110 = sadd.s32 %s109, 1
      %p113 = scmp.eq.s32.totalorder %s12, 1
      %p114 = scmp.ne.s32.totalorder %s109, %s111
      %p115 = scmp.eq.s32.totalorder %s12, 0
      %p116 = por %p114, %p115
      %p117 = scmp.ne.s32.totalorder %s109, %s111
      %p118 = scmp.eq.s32.totalorder %s17, 1
      %p119 = por %p117, %p118
      %p120 = scmp.ne.s32.totalorder %s111, %s112
      %p121 = scmp.eq.s32.totalorder %s17, 0
      %p122 = por %p120, %p121
      %p123 = scmp.ne.s32.totalorder %s111, %s112
      %p124 = scmp.eq.s32.totalorder %s18, 1
      %p125 = por %p123, %p124
      %p127 = scmp.ne.s32.totalorder %s112, %s126
      %p128 = scmp.eq.s32.totalorder %s18, 0
      %p129 = por %p127, %p128
      %s130 = ssub.s32 %s12, %s19
      %p131 = scmp.eq.s32.totalorder %s130, 0
      %s133 = sadd.s32 %s132, 1
      %s134 = scalar_select %p131, %s132, %s133
      %p137 = pneg %p131
      %p138 = scmp.eq.s32.totalorder %s12, 1
      %p139 = por %p137, %p138
      %p140 = scmp.ne.s32.totalorder %s132, %s135
      %p141 = scmp.eq.s32.totalorder %s12, 0
      %p142 = por %p140, %p141
      %p143 = scmp.ne.s32.totalorder %s132, %s135
      %p144 = scmp.eq.s32.totalorder %s17, 1
      %p145 = por %p143, %p144
      %p146 = scmp.ne.s32.totalorder %s135, %s136
      %p147 = scmp.eq.s32.totalorder %s17, 0
      %p148 = por %p146, %p147
      %p149 = scmp.ne.s32.totalorder %s135, %s136
      %p150 = scmp.eq.s32.totalorder %s18, 1
      %p151 = por %p149, %p150
      %p153 = scmp.ne.s32.totalorder %s136, %s152
      %p154 = scmp.eq.s32.totalorder %s18, 0
      %p155 = por %p153, %p154
      %p156 = scmp.le.s32.totalorder 1, %s12
      %p157 = scmp.lt.s32.totalorder %s12, 3
      %p158 = pnand %p156, %p157
      %p159 = pneg %p158
      // Predicated region
      $region9: #{model_forward.1} parent=5 // pred_check
        _
      $region10: #{model_forward.1} parent=5 // pred_check_branch
        %161 = sbr.rel (%p158) target = $region12
      $region11: #{model_forward.1} parent=5 // pred_region
        %s162 = ssub.s32 %s12, 1
        // Predicated region
        $region13: #{model_forward.1} parent=11 // pred_check
          %p163 = pneg %p59
        $region14: #{model_forward.1} parent=11 // pred_check_branch
          %165 = sbr.rel (%p163) target = $region16
        $region15: #{model_forward.1} parent=11 // pred_region
          %s167 = ssub.s32 24576, 24576
          %168 = vsyncadd [#allocation3], %s167
          %s169 = sshll.u32 [#allocation2], 4
          %s170 = int_to_ptr.vmem [resolvable:$true] %s169
          %175 = dma.hbm_to_vmem [thread:$0]  %s1, 24576, %s170, [#allocation3], 256, 256, 16
        $region16: #{model_forward.1} parent=11 // pred_fallthru
          _
        // Predicated region
        $region17: #{model_forward.1} parent=11 // pred_check
          %p176 = pneg %p80
        $region18: #{model_forward.1} parent=11 // pred_check_branch
          %178 = sbr.rel (%p176) target = $region20
        $region19: #{model_forward.1} parent=11 // pred_region
          _
        $region20: #{model_forward.1} parent=11 // pred_fallthru
          _
        // Predicated region
        $region21: #{model_forward.1} parent=11 // pred_check
          %p179 = pneg %p101
        $region22: #{model_forward.1} parent=11 // pred_check_branch
          %181 = sbr.rel (%p179) target = $region24
        $region23: #{model_forward.1} parent=11 // pred_region
          _
        $region24: #{model_forward.1} parent=11 // pred_fallthru
          _
        // Predicated region
        $region25: #{model_forward.1} parent=11 // pred_check
          %p182 = pneg %p122
        $region26: #{model_forward.1} parent=11 // pred_check_branch
          %184 = sbr.rel (%p182) target = $region28
        $region27: #{model_forward.1} parent=11 // pred_region
          _
        $region28: #{model_forward.1} parent=11 // pred_fallthru
          _
      $region12: #{model_forward.1} parent=5 // pred_fallthru
        _
      %p185 = scmp.lt.s32.totalorder %s12, 2
      // Predicated region
      $region29: #{model_forward.1} parent=5 // pred_check
        %p186 = pneg %p185
      $region30: #{model_forward.1} parent=5 // pred_check_branch
        %188 = sbr.rel (%p186) target = $region32
      $region31: #{model_forward.1} parent=5 // pred_region
        // Predicated region
        $region33: #{model_forward.1} parent=31 // pred_check
          %p189 = pneg %p32
        $region34: #{model_forward.1} parent=31 // pred_check_branch
          %191 = sbr.rel (%p189) target = $region36
        $region35: #{model_forward.1} parent=31 // pred_region
          %p192 = scmp.lt.s32.totalorder %s12, 1
          %s193 = scalar_select %p192, %s12, 1
          %s194 = smul.addr %s193, 6
          %s195 = smul.addr %s194, 8
          %s196 = scalar_lea.vmem %s0, %s195
        $region36: #{model_forward.1} parent=31 // pred_fallthru
          _
      $region32: #{model_forward.1} parent=5 // pred_fallthru
        _
      %p197 = scmp.le.s32.totalorder 1, %s12
      %p198 = scmp.lt.s32.totalorder %s12, 3
      %p199 = pnand %p197, %p198
      %p200 = pneg %p199
      // Predicated region
      $region37: #{model_forward.1} parent=5 // pred_check
        _
      $region38: #{model_forward.1} parent=5 // pred_check_branch
        %202 = sbr.rel (%p199) target = $region40
      $region39: #{model_forward.1} parent=5 // pred_region
        %s203 = ssub.s32 %s12, 1
        // Predicated region
        $region41: #{model_forward.1} parent=39 // pred_check
          %p204 = pneg %p59
        $region42: #{model_forward.1} parent=39 // pred_check_branch
          %206 = sbr.rel (%p204) target = $region44
        $region43: #{model_forward.1} parent=39 // pred_region
          %207 = dma.done [#allocation3], 24576
        $region44: #{model_forward.1} parent=39 // pred_fallthru
          _
        %p208 = scmp.lt.s32.totalorder %s17, 1
        %s209 = scalar_select %p208, %s17, 1
        %s210 = smul.addr %s209, 6
        %s211 = smul.addr %s210, 8
        %s212 = scalar_lea.vmem %s0, %s211
        %p213 = pneg %p38
        %p214 = pneg %p35
        %p215 = pneg %p59
        %p216 = pneg %p56
        %p217 = pneg %p80
        %p218 = pneg %p77
        %p219 = pneg %p101
        %p220 = pneg %p98
        %p221 = pneg %p122
        %p222 = pneg %p119
        %p223 = pneg %p148
        %p224 = pneg %p145
        %p225 = scmp.lt.s32.totalorder %s17, 1
        %s226 = scalar_select %p225, %s17, 1
        %s227 = smul.addr %s226, 8
        %s228 = scalar_lea.vmem %s5, %s227
        %p229 = scmp.lt.s32.totalorder %s17, 1
        %s230 = scalar_select %p229, %s17, 1
        %s231 = smul.addr %s230, 6
        %s232 = smul.addr %s231, 8
        %s233 = scalar_lea.vmem %s0, %s232
        %p234 = scmp.lt.s32.totalorder %s17, 1
        %s235 = scalar_select %p234, %s17, 1
        %s236 = smul.addr %s235, 8
        %s237 = scalar_lea.vmem %s5, %s236
        %v239 = vld [vmem:[%s233] sm:$0xff]
        %v240 = vld [vmem:[%s233 + $0x8] sm:$0xff]
        %v241 = vld [vmem:[%s233 + $0x10] sm:$0xff]
        %v242 = vld [vmem:[%s233 + $0x18] sm:$0xff]
        %v243 = vld [vmem:[%s233 + $0x20] sm:$0xff]
        %v244 = vld [vmem:[%s233 + $0x28] sm:$0xff]
        %v245 = vpack.c.bf16 %v239, %v239
        %v246 = vpack.c.bf16 %v240, %v240
        %v247 = vpack.c.bf16 %v241, %v241
        %v248 = vpack.c.bf16 %v242, %v242
        %v249 = vpack.c.bf16 %v243, %v243
        %v250 = vpack.c.bf16 %v244, %v244
        %v251 = vld [vmem:[#allocation2] sm:$0xf]
        %v252 = vld [vmem:[#allocation2 + $0x10] sm:$0xf]
        %v253 = vld [vmem:[#allocation2 + $0x20] sm:$0xf]
        %v254 = vld [vmem:[#allocation2 + $0x30] sm:$0xf]
        %v255 = vld [vmem:[#allocation2 + $0x40] sm:$0xf]
        %v256 = vld [vmem:[#allocation2 + $0x50] sm:$0xf]
        %v257 = vld [vmem:[#allocation2 + $0x60] sm:$0xf]
        %v258 = vld [vmem:[#allocation2 + $0x70] sm:$0xf]
        %v259 = vld [vmem:[#allocation2 + $0x80] sm:$0xf]
        %v260 = vld [vmem:[#allocation2 + $0x90] sm:$0xf]
        %v261 = vld [vmem:[#allocation2 + $0xa0] sm:$0xf]
        %v262 = vld [vmem:[#allocation2 + $0xb0] sm:$0xf]
        %v263 = vld [vmem:[#allocation2 + $0xc0] sm:$0xf]
        %v264 = vld [vmem:[#allocation2 + $0xd0] sm:$0xf]
        %v265 = vld [vmem:[#allocation2 + $0xe0] sm:$0xf]
        %v266 = vld [vmem:[#allocation2 + $0xf0] sm:$0xf]
        %v267 = vld [vmem:[#allocation2 + $0x100] sm:$0xf]
        %v268 = vld [vmem:[#allocation2 + $0x110] sm:$0xf]
        %v269 = vld [vmem:[#allocation2 + $0x120] sm:$0xf]
        %v270 = vld [vmem:[#allocation2 + $0x130] sm:$0xf]
        %v271 = vld [vmem:[#allocation2 + $0x140] sm:$0xf]
        %v272 = vld [vmem:[#allocation2 + $0x150] sm:$0xf]
        %v273 = vld [vmem:[#allocation2 + $0x160] sm:$0xf]
        %v274 = vld [vmem:[#allocation2 + $0x170] sm:$0xf]
        %v275 = vld [vmem:[#allocation2 + $0x180] sm:$0xf]
        %v276 = vld [vmem:[#allocation2 + $0x190] sm:$0xf]
        %v277 = vld [vmem:[#allocation2 + $0x1a0] sm:$0xf]
        %v278 = vld [vmem:[#allocation2 + $0x1b0] sm:$0xf]
        %v279 = vld [vmem:[#allocation2 + $0x1c0] sm:$0xf]
        %v280 = vld [vmem:[#allocation2 + $0x1d0] sm:$0xf]
        %v281 = vld [vmem:[#allocation2 + $0x1e0] sm:$0xf]
        %v282 = vld [vmem:[#allocation2 + $0x1f0] sm:$0xf]
        %v283 = vld [vmem:[#allocation2 + $0x200] sm:$0xf]
        %v284 = vld [vmem:[#allocation2 + $0x210] sm:$0xf]
        %v285 = vld [vmem:[#allocation2 + $0x220] sm:$0xf]
        %v286 = vld [vmem:[#allocation2 + $0x230] sm:$0xf]
        %v287 = vld [vmem:[#allocation2 + $0x240] sm:$0xf]
        %v288 = vld [vmem:[#allocation2 + $0x250] sm:$0xf]
        %v289 = vld [vmem:[#allocation2 + $0x260] sm:$0xf]
        %v290 = vld [vmem:[#allocation2 + $0x270] sm:$0xf]
        %v291 = vld [vmem:[#allocation2 + $0x280] sm:$0xf]
        %v292 = vld [vmem:[#allocation2 + $0x290] sm:$0xf]
        %v293 = vld [vmem:[#allocation2 + $0x2a0] sm:$0xf]
        %v294 = vld [vmem:[#allocation2 + $0x2b0] sm:$0xf]
        %v295 = vld [vmem:[#allocation2 + $0x2c0] sm:$0xf]
        %v296 = vld [vmem:[#allocation2 + $0x2d0] sm:$0xf]
        %v297 = vld [vmem:[#allocation2 + $0x2e0] sm:$0xf]
        %v298 = vld [vmem:[#allocation2 + $0x2f0] sm:$0xf]
        %v299 = vld [vmem:[#allocation2 + $0x300] sm:$0xf]
        %v300 = vld [vmem:[#allocation2 + $0x310] sm:$0xf]
        %v301 = vld [vmem:[#allocation2 + $0x320] sm:$0xf]
        %v302 = vld [vmem:[#allocation2 + $0x330] sm:$0xf]
        %v303 = vld [vmem:[#allocation2 + $0x340] sm:$0xf]
        %v304 = vld [vmem:[#allocation2 + $0x350] sm:$0xf]
        %v305 = vld [vmem:[#allocation2 + $0x360] sm:$0xf]
        %v306 = vld [vmem:[#allocation2 + $0x370] sm:$0xf]
        %v307 = vld [vmem:[#allocation2 + $0x380] sm:$0xf]
        %v308 = vld [vmem:[#allocation2 + $0x390] sm:$0xf]
        %v309 = vld [vmem:[#allocation2 + $0x3a0] sm:$0xf]
        %v310 = vld [vmem:[#allocation2 + $0x3b0] sm:$0xf]
        %v311 = vld [vmem:[#allocation2 + $0x3c0] sm:$0xf]
        %v312 = vld [vmem:[#allocation2 + $0x3d0] sm:$0xf]
        %v313 = vld [vmem:[#allocation2 + $0x3e0] sm:$0xf]
        %v314 = vld [vmem:[#allocation2 + $0x3f0] sm:$0xf]
        %v315 = vld [vmem:[#allocation2 + $0x400] sm:$0xf]
        %v316 = vld [vmem:[#allocation2 + $0x410] sm:$0xf]
        %v317 = vld [vmem:[#allocation2 + $0x420] sm:$0xf]
        %v318 = vld [vmem:[#allocation2 + $0x430] sm:$0xf]
        %v319 = vld [vmem:[#allocation2 + $0x440] sm:$0xf]
        %v320 = vld [vmem:[#allocation2 + $0x450] sm:$0xf]
        %v321 = vld [vmem:[#allocation2 + $0x460] sm:$0xf]
        %v322 = vld [vmem:[#allocation2 + $0x470] sm:$0xf]
        %v323 = vld [vmem:[#allocation2 + $0x480] sm:$0xf]
        %v324 = vld [vmem:[#allocation2 + $0x490] sm:$0xf]
        %v325 = vld [vmem:[#allocation2 + $0x4a0] sm:$0xf]
        %v326 = vld [vmem:[#allocation2 + $0x4b0] sm:$0xf]
        %v327 = vld [vmem:[#allocation2 + $0x4c0] sm:$0xf]
        %v328 = vld [vmem:[#allocation2 + $0x4d0] sm:$0xf]
        %v329 = vld [vmem:[#allocation2 + $0x4e0] sm:$0xf]
        %v330 = vld [vmem:[#allocation2 + $0x4f0] sm:$0xf]
        %v331 = vld [vmem:[#allocation2 + $0x500] sm:$0xf]
        %v332 = vld [vmem:[#allocation2 + $0x510] sm:$0xf]
        %v333 = vld [vmem:[#allocation2 + $0x520] sm:$0xf]
        %v334 = vld [vmem:[#allocation2 + $0x530] sm:$0xf]
        %v335 = vld [vmem:[#allocation2 + $0x540] sm:$0xf]
        %v336 = vld [vmem:[#allocation2 + $0x550] sm:$0xf]
        %v337 = vld [vmem:[#allocation2 + $0x560] sm:$0xf]
        %v338 = vld [vmem:[#allocation2 + $0x570] sm:$0xf]
        %v339 = vld [vmem:[#allocation2 + $0x580] sm:$0xf]
        %v340 = vld [vmem:[#allocation2 + $0x590] sm:$0xf]
        %v341 = vld [vmem:[#allocation2 + $0x5a0] sm:$0xf]
        %v342 = vld [vmem:[#allocation2 + $0x5b0] sm:$0xf]
        %v343 = vld [vmem:[#allocation2 + $0x5c0] sm:$0xf]
        %v344 = vld [vmem:[#allocation2 + $0x5d0] sm:$0xf]
        %v345 = vld [vmem:[#allocation2 + $0x5e0] sm:$0xf]
        %v346 = vld [vmem:[#allocation2 + $0x5f0] sm:$0xf]
        %v347 = vld [vmem:[%s2] sm:$0x1]
        %v349 = vlaneseq
        %v350 = vshrl.u32 %v349, 7
        %v351 = vsub.s32 0, %v350
        %v352 = vrot.slane %v347, %v351
        %v450 = vunpack.c.l.b16 %v251
        %v451 = vunpack.c.l.b16 %v252
        %v452 = vunpack.c.l.b16 %v253
        %v453 = vunpack.c.l.b16 %v254
        %v454 = vunpack.c.l.b16 %v255
        %v455 = vunpack.c.l.b16 %v256
        %v456 = vunpack.c.l.b16 %v257
        %v457 = vunpack.c.l.b16 %v258
        %v458 = vunpack.c.l.b16 %v259
        %v459 = vunpack.c.l.b16 %v260
        %v460 = vunpack.c.l.b16 %v261
        %v461 = vunpack.c.l.b16 %v262
        %v462 = vunpack.c.l.b16 %v263
        %v463 = vunpack.c.l.b16 %v264
        %v464 = vunpack.c.l.b16 %v265
        %v465 = vunpack.c.l.b16 %v266
        %v466 = vunpack.c.l.b16 %v267
        %v467 = vunpack.c.l.b16 %v268
        %v468 = vunpack.c.l.b16 %v269
        %v469 = vunpack.c.l.b16 %v270
        %v470 = vunpack.c.l.b16 %v271
        %v471 = vunpack.c.l.b16 %v272
        %v472 = vunpack.c.l.b16 %v273
        %v473 = vunpack.c.l.b16 %v274
        %v474 = vunpack.c.l.b16 %v275
        %v475 = vunpack.c.l.b16 %v276
        %v476 = vunpack.c.l.b16 %v277
        %v477 = vunpack.c.l.b16 %v278
        %v478 = vunpack.c.l.b16 %v279
        %v479 = vunpack.c.l.b16 %v280
        %v480 = vunpack.c.l.b16 %v281
        %v481 = vunpack.c.l.b16 %v282
        %v482 = vunpack.c.l.b16 %v283
        %v483 = vunpack.c.l.b16 %v284
        %v484 = vunpack.c.l.b16 %v285
        %v485 = vunpack.c.l.b16 %v286
        %v486 = vunpack.c.l.b16 %v287
        %v487 = vunpack.c.l.b16 %v288
        %v488 = vunpack.c.l.b16 %v289
        %v489 = vunpack.c.l.b16 %v290
        %v490 = vunpack.c.l.b16 %v291
        %v491 = vunpack.c.l.b16 %v292
        %v492 = vunpack.c.l.b16 %v293
        %v493 = vunpack.c.l.b16 %v294
        %v494 = vunpack.c.l.b16 %v295
        %v495 = vunpack.c.l.b16 %v296
        %v496 = vunpack.c.l.b16 %v297
        %v497 = vunpack.c.l.b16 %v298
        %v498 = vunpack.c.l.b16 %v299
        %v499 = vunpack.c.l.b16 %v300
        %v500 = vunpack.c.l.b16 %v301
        %v501 = vunpack.c.l.b16 %v302
        %v502 = vunpack.c.l.b16 %v303
        %v503 = vunpack.c.l.b16 %v304
        %v504 = vunpack.c.l.b16 %v305
        %v505 = vunpack.c.l.b16 %v306
        %v506 = vunpack.c.l.b16 %v307
        %v507 = vunpack.c.l.b16 %v308
        %v508 = vunpack.c.l.b16 %v309
        %v509 = vunpack.c.l.b16 %v310
        %v510 = vunpack.c.l.b16 %v311
        %v511 = vunpack.c.l.b16 %v312
        %v512 = vunpack.c.l.b16 %v313
        %v513 = vunpack.c.l.b16 %v314
        %v514 = vunpack.c.l.b16 %v315
        %v515 = vunpack.c.l.b16 %v316
        %v516 = vunpack.c.l.b16 %v317
        %v517 = vunpack.c.l.b16 %v318
        %v518 = vunpack.c.l.b16 %v319
        %v519 = vunpack.c.l.b16 %v320
        %v520 = vunpack.c.l.b16 %v321
        %v521 = vunpack.c.l.b16 %v322
        %v522 = vunpack.c.l.b16 %v323
        %v523 = vunpack.c.l.b16 %v324
        %v524 = vunpack.c.l.b16 %v325
        %v525 = vunpack.c.l.b16 %v326
        %v526 = vunpack.c.l.b16 %v327
        %v527 = vunpack.c.l.b16 %v328
        %v528 = vunpack.c.l.b16 %v329
        %v529 = vunpack.c.l.b16 %v330
        %v530 = vunpack.c.l.b16 %v331
        %v531 = vunpack.c.l.b16 %v332
        %v532 = vunpack.c.l.b16 %v333
        %v533 = vunpack.c.l.b16 %v334
        %v534 = vunpack.c.l.b16 %v335
        %v535 = vunpack.c.l.b16 %v336
        %v536 = vunpack.c.l.b16 %v337
        %v537 = vunpack.c.l.b16 %v338
        %v538 = vunpack.c.l.b16 %v339
        %v539 = vunpack.c.l.b16 %v340
        %v540 = vunpack.c.l.b16 %v341
        %v541 = vunpack.c.l.b16 %v342
        %v542 = vunpack.c.l.b16 %v343
        %v543 = vunpack.c.l.b16 %v344
        %v544 = vunpack.c.l.b16 %v345
        %v545 = vunpack.c.l.b16 %v346
        %v546 = vpack.c.b16 %v451, %v450
        %v547 = vpack.c.b16 %v453, %v452
        %v548 = vpack.c.b16 %v455, %v454
        %v549 = vpack.c.b16 %v457, %v456
        %v550 = vpack.c.b16 %v459, %v458
        %v551 = vpack.c.b16 %v461, %v460
        %v552 = vpack.c.b16 %v463, %v462
        %v553 = vpack.c.b16 %v465, %v464
        %v554 = vpack.c.b16 %v467, %v466
        %v555 = vpack.c.b16 %v469, %v468
        %v556 = vpack.c.b16 %v471, %v470
        %v557 = vpack.c.b16 %v473, %v472
        %v558 = vpack.c.b16 %v475, %v474
        %v559 = vpack.c.b16 %v477, %v476
        %v560 = vpack.c.b16 %v479, %v478
        %v561 = vpack.c.b16 %v481, %v480
        %v562 = vpack.c.b16 %v483, %v482
        %v563 = vpack.c.b16 %v485, %v484
        %v564 = vpack.c.b16 %v487, %v486
        %v565 = vpack.c.b16 %v489, %v488
        %v566 = vpack.c.b16 %v491, %v490
        %v567 = vpack.c.b16 %v493, %v492
        %v568 = vpack.c.b16 %v495, %v494
        %v569 = vpack.c.b16 %v497, %v496
        %v570 = vpack.c.b16 %v499, %v498
        %v571 = vpack.c.b16 %v501, %v500
        %v572 = vpack.c.b16 %v503, %v502
        %v573 = vpack.c.b16 %v505, %v504
        %v574 = vpack.c.b16 %v507, %v506
        %v575 = vpack.c.b16 %v509, %v508
        %v576 = vpack.c.b16 %v511, %v510
        %v577 = vpack.c.b16 %v513, %v512
        %v578 = vpack.c.b16 %v515, %v514
        %v579 = vpack.c.b16 %v517, %v516
        %v580 = vpack.c.b16 %v519, %v518
        %v581 = vpack.c.b16 %v521, %v520
        %v582 = vpack.c.b16 %v523, %v522
        %v583 = vpack.c.b16 %v525, %v524
        %v584 = vpack.c.b16 %v527, %v526
        %v585 = vpack.c.b16 %v529, %v528
        %v586 = vpack.c.b16 %v531, %v530
        %v587 = vpack.c.b16 %v533, %v532
        %v588 = vpack.c.b16 %v535, %v534
        %v589 = vpack.c.b16 %v537, %v536
        %v590 = vpack.c.b16 %v539, %v538
        %v591 = vpack.c.b16 %v541, %v540
        %v592 = vpack.c.b16 %v543, %v542
        %v593 = vpack.c.b16 %v545, %v544
        %642 = vmatprep.subr.bf16.mxu0 0
        %643 = vmatpush1.bf16.msra.mxu0 %v546
        %644 = vmatprep.subr.bf16.mxu0 0
        %645 = vmatpush1.bf16.msra.mxu0 %v547
        %646 = vmatprep.subr.bf16.mxu0 0
        %647 = vmatpush1.bf16.msra.mxu0 %v548
        %648 = vmatprep.subr.bf16.mxu0 0
        %649 = vmatpush1.bf16.msra.mxu0 %v549
        %650 = vmatprep.subr.bf16.mxu0 0
        %651 = vmatpush1.bf16.msra.mxu0 %v550
        %652 = vmatprep.subr.bf16.mxu0 0
        %653 = vmatpush1.bf16.msra.mxu0 %v551
        %654 = vmatprep.subr.bf16.mxu0 0
        %655 = vmatpush1.bf16.msra.mxu0 %v552
        %656 = vmatprep.subr.bf16.mxu0 0
        %657 = vmatpush1.bf16.msra.mxu0 %v553
        %658 = vmatprep.subr.bf16.mxu0 0
        %659 = vmatpush1.bf16.msra.mxu0 %v554
        %660 = vmatprep.subr.bf16.mxu0 0
        %661 = vmatpush1.bf16.msra.mxu0 %v555
        %662 = vmatprep.subr.bf16.mxu0 0
        %663 = vmatpush1.bf16.msra.mxu0 %v556
        %664 = vmatprep.subr.bf16.mxu0 0
        %665 = vmatpush1.bf16.msra.mxu0 %v557
        %666 = vmatprep.subr.bf16.mxu0 0
        %667 = vmatpush1.bf16.msra.mxu0 %v558
        %668 = vmatprep.subr.bf16.mxu0 0
        %669 = vmatpush1.bf16.msra.mxu0 %v559
        %670 = vmatprep.subr.bf16.mxu0 0
        %671 = vmatpush1.bf16.msra.mxu0 %v560
        %672 = vmatprep.subr.bf16.mxu0 0
        %673 = vmatpush1.bf16.msra.mxu0 %v561
        %674 = vmatprep.mubr.bf16.mxu0 %v246
        %675 = vmatmul.mubr.bf16.gmra.mrb[0].mxu0 %v245
        %v676 = vpop.f32.mrb[0].mxu0
        %v677 = vadd.f32 %v352, %v676
        %v678 = vpop.f32.mrb[0].mxu0
        %v679 = vpop.f32.mrb[0].mxu0
        %v680 = vpop.f32.mrb[0].mxu0
        %681 = vdwg.mxu0
        %682 = vmatprep.subr.bf16.mxu0 0
        %683 = vmatpush1.bf16.msra.mxu0 %v562
        %684 = vmatprep.subr.bf16.mxu0 0
        %685 = vmatpush1.bf16.msra.mxu0 %v563
        %686 = vmatprep.subr.bf16.mxu0 0
        %687 = vmatpush1.bf16.msra.mxu0 %v564
        %688 = vmatprep.subr.bf16.mxu0 0
        %689 = vmatpush1.bf16.msra.mxu0 %v565
        %690 = vmatprep.subr.bf16.mxu0 0
        %691 = vmatpush1.bf16.msra.mxu0 %v566
        %692 = vmatprep.subr.bf16.mxu0 0
        %693 = vmatpush1.bf16.msra.mxu0 %v567
        %694 = vmatprep.subr.bf16.mxu0 0
        %695 = vmatpush1.bf16.msra.mxu0 %v568
        %696 = vmatprep.subr.bf16.mxu0 0
        %697 = vmatpush1.bf16.msra.mxu0 %v569
        %698 = vmatprep.subr.bf16.mxu0 0
        %699 = vmatpush1.bf16.msra.mxu0 %v570
        %700 = vmatprep.subr.bf16.mxu0 0
        %701 = vmatpush1.bf16.msra.mxu0 %v571
        %702 = vmatprep.subr.bf16.mxu0 0
        %703 = vmatpush1.bf16.msra.mxu0 %v572
        %704 = vmatprep.subr.bf16.mxu0 0
        %705 = vmatpush1.bf16.msra.mxu0 %v573
        %706 = vmatprep.subr.bf16.mxu0 0
        %707 = vmatpush1.bf16.msra.mxu0 %v574
        %708 = vmatprep.subr.bf16.mxu0 0
        %709 = vmatpush1.bf16.msra.mxu0 %v575
        %710 = vmatprep.subr.bf16.mxu0 0
        %711 = vmatpush1.bf16.msra.mxu0 %v576
        %712 = vmatprep.subr.bf16.mxu0 0
        %713 = vmatpush1.bf16.msra.mxu0 %v577
        %714 = vmatprep.mubr.bf16.mxu0 %v248
        %715 = vmatmul.mubr.bf16.gmra.mrb[0].mxu0 %v247
        %v716 = vpop.f32.mrb[0].mxu0
        %v717 = vadd.f32 %v677, %v716
        %v718 = vpop.f32.mrb[0].mxu0
        %v719 = vpop.f32.mrb[0].mxu0
        %v720 = vpop.f32.mrb[0].mxu0
        %721 = vdwg.mxu0
        %722 = vmatprep.subr.bf16.mxu0 0
        %723 = vmatpush1.bf16.msra.mxu0 %v578
        %724 = vmatprep.subr.bf16.mxu0 0
        %725 = vmatpush1.bf16.msra.mxu0 %v579
        %726 = vmatprep.subr.bf16.mxu0 0
        %727 = vmatpush1.bf16.msra.mxu0 %v580
        %728 = vmatprep.subr.bf16.mxu0 0
        %729 = vmatpush1.bf16.msra.mxu0 %v581
        %730 = vmatprep.subr.bf16.mxu0 0
        %731 = vmatpush1.bf16.msra.mxu0 %v582
        %732 = vmatprep.subr.bf16.mxu0 0
        %733 = vmatpush1.bf16.msra.mxu0 %v583
        %734 = vmatprep.subr.bf16.mxu0 0
        %735 = vmatpush1.bf16.msra.mxu0 %v584
        %736 = vmatprep.subr.bf16.mxu0 0
        %737 = vmatpush1.bf16.msra.mxu0 %v585
        %738 = vmatprep.subr.bf16.mxu0 0
        %739 = vmatpush1.bf16.msra.mxu0 %v586
        %740 = vmatprep.subr.bf16.mxu0 0
        %741 = vmatpush1.bf16.msra.mxu0 %v587
        %742 = vmatprep.subr.bf16.mxu0 0
        %743 = vmatpush1.bf16.msra.mxu0 %v588
        %744 = vmatprep.subr.bf16.mxu0 0
        %745 = vmatpush1.bf16.msra.mxu0 %v589
        %746 = vmatprep.subr.bf16.mxu0 0
        %747 = vmatpush1.bf16.msra.mxu0 %v590
        %748 = vmatprep.subr.bf16.mxu0 0
        %749 = vmatpush1.bf16.msra.mxu0 %v591
        %750 = vmatprep.subr.bf16.mxu0 0
        %751 = vmatpush1.bf16.msra.mxu0 %v592
        %752 = vmatprep.subr.bf16.mxu0 0
        %753 = vmatpush1.bf16.msra.mxu0 %v593
        %754 = vmatprep.mubr.bf16.mxu0 %v250
        %755 = vmatmul.mubr.bf16.gmra.mrb[0].mxu0 %v249
        %v756 = vpop.f32.mrb[0].mxu0
        %v757 = vadd.f32 %v717, %v756
        %v758 = vpop.f32.mrb[0].mxu0
        %v759 = vpop.f32.mrb[0].mxu0
        %v760 = vpop.f32.mrb[0].mxu0
        %761 = vdwg.mxu0
        %v762 = vpack.c.bf16 %v757, %v757
        %v763 = vld [vmem:[%s3] sm:$0xf]
        %v764 = vld [vmem:[%s3 + $0x4] sm:$0xf]
        %v765 = vld [vmem:[%s3 + $0x8] sm:$0xf]
        %v766 = vld [vmem:[%s3 + $0xc] sm:$0xf]
        %v767 = vld [vmem:[%s3 + $0x10] sm:$0xf]
        %v768 = vld [vmem:[%s3 + $0x14] sm:$0xf]
        %v769 = vld [vmem:[%s3 + $0x18] sm:$0xf]
        %v770 = vld [vmem:[%s3 + $0x1c] sm:$0xf]
        %v771 = vld [vmem:[%s3 + $0x20] sm:$0xf]
        %v772 = vld [vmem:[%s3 + $0x24] sm:$0xf]
        %v773 = vld [vmem:[%s3 + $0x28] sm:$0xf]
        %v774 = vld [vmem:[%s3 + $0x2c] sm:$0xf]
        %v775 = vld [vmem:[%s3 + $0x30] sm:$0xf]
        %v776 = vld [vmem:[%s3 + $0x34] sm:$0xf]
        %v777 = vld [vmem:[%s3 + $0x38] sm:$0xf]
        %v778 = vld [vmem:[%s3 + $0x3c] sm:$0xf]
        %v779 = vld [vmem:[#allocation2 + $0x4] sm:$0xf]
        %v780 = vld [vmem:[#allocation2 + $0x14] sm:$0xf]
        %v781 = vld [vmem:[#allocation2 + $0x24] sm:$0xf]
        %v782 = vld [vmem:[#allocation2 + $0x34] sm:$0xf]
        %v783 = vld [vmem:[#allocation2 + $0x44] sm:$0xf]
        %v784 = vld [vmem:[#allocation2 + $0x54] sm:$0xf]
        %v785 = vld [vmem:[#allocation2 + $0x64] sm:$0xf]
        %v786 = vld [vmem:[#allocation2 + $0x74] sm:$0xf]
        %v787 = vld [vmem:[#allocation2 + $0x84] sm:$0xf]
        %v788 = vld [vmem:[#allocation2 + $0x94] sm:$0xf]
        %v789 = vld [vmem:[#allocation2 + $0xa4] sm:$0xf]
        %v790 = vld [vmem:[#allocation2 + $0xb4] sm:$0xf]
        %v791 = vld [vmem:[#allocation2 + $0xc4] sm:$0xf]
        %v792 = vld [vmem:[#allocation2 + $0xd4] sm:$0xf]
        %v793 = vld [vmem:[#allocation2 + $0xe4] sm:$0xf]
        %v794 = vld [vmem:[#allocation2 + $0xf4] sm:$0xf]
        %v795 = vld [vmem:[#allocation2 + $0x104] sm:$0xf]
        %v796 = vld [vmem:[#allocation2 + $0x114] sm:$0xf]
        %v797 = vld [vmem:[#allocation2 + $0x124] sm:$0xf]
        %v798 = vld [vmem:[#allocation2 + $0x134] sm:$0xf]
        %v799 = vld [vmem:[#allocation2 + $0x144] sm:$0xf]
        %v800 = vld [vmem:[#allocation2 + $0x154] sm:$0xf]
        %v801 = vld [vmem:[#allocation2 + $0x164] sm:$0xf]
        %v802 = vld [vmem:[#allocation2 + $0x174] sm:$0xf]
        %v803 = vld [vmem:[#allocation2 + $0x184] sm:$0xf]
        %v804 = vld [vmem:[#allocation2 + $0x194] sm:$0xf]
        %v805 = vld [vmem:[#allocation2 + $0x1a4] sm:$0xf]
        %v806 = vld [vmem:[#allocation2 + $0x1b4] sm:$0xf]
        %v807 = vld [vmem:[#allocation2 + $0x1c4] sm:$0xf]
        %v808 = vld [vmem:[#allocation2 + $0x1d4] sm:$0xf]
        %v809 = vld [vmem:[#allocation2 + $0x1e4] sm:$0xf]
        %v810 = vld [vmem:[#allocation2 + $0x1f4] sm:$0xf]
        %v811 = vld [vmem:[#allocation2 + $0x204] sm:$0xf]
        %v812 = vld [vmem:[#allocation2 + $0x214] sm:$0xf]
        %v813 = vld [vmem:[#allocation2 + $0x224] sm:$0xf]
        %v814 = vld [vmem:[#allocation2 + $0x234] sm:$0xf]
        %v815 = vld [vmem:[#allocation2 + $0x244] sm:$0xf]
        %v816 = vld [vmem:[#allocation2 + $0x254] sm:$0xf]
        %v817 = vld [vmem:[#allocation2 + $0x264] sm:$0xf]
        %v818 = vld [vmem:[#allocation2 + $0x274] sm:$0xf]
        %v819 = vld [vmem:[#allocation2 + $0x284] sm:$0xf]
        %v820 = vld [vmem:[#allocation2 + $0x294] sm:$0xf]
        %v821 = vld [vmem:[#allocation2 + $0x2a4] sm:$0xf]
        %v822 = vld [vmem:[#allocation2 + $0x2b4] sm:$0xf]
        %v823 = vld [vmem:[#allocation2 + $0x2c4] sm:$0xf]
        %v824 = vld [vmem:[#allocation2 + $0x2d4] sm:$0xf]
        %v825 = vld [vmem:[#allocation2 + $0x2e4] sm:$0xf]
        %v826 = vld [vmem:[#allocation2 + $0x2f4] sm:$0xf]
        %v827 = vld [vmem:[#allocation2 + $0x304] sm:$0xf]
        %v828 = vld [vmem:[#allocation2 + $0x314] sm:$0xf]
        %v829 = vld [vmem:[#allocation2 + $0x324] sm:$0xf]
        %v830 = vld [vmem:[#allocation2 + $0x334] sm:$0xf]
        %v831 = vld [vmem:[#allocation2 + $0x344] sm:$0xf]
        %v832 = vld [vmem:[#allocation2 + $0x354] sm:$0xf]
        %v833 = vld [vmem:[#allocation2 + $0x364] sm:$0xf]
        %v834 = vld [vmem:[#allocation2 + $0x374] sm:$0xf]
        %v835 = vld [vmem:[#allocation2 + $0x384] sm:$0xf]
        %v836 = vld [vmem:[#allocation2 + $0x394] sm:$0xf]
        %v837 = vld [vmem:[#allocation2 + $0x3a4] sm:$0xf]
        %v838 = vld [vmem:[#allocation2 + $0x3b4] sm:$0xf]
        %v839 = vld [vmem:[#allocation2 + $0x3c4] sm:$0xf]
        %v840 = vld [vmem:[#allocation2 + $0x3d4] sm:$0xf]
        %v841 = vld [vmem:[#allocation2 + $0x3e4] sm:$0xf]
        %v842 = vld [vmem:[#allocation2 + $0x3f4] sm:$0xf]
        %v843 = vld [vmem:[#allocation2 + $0x404] sm:$0xf]
        %v844 = vld [vmem:[#allocation2 + $0x414] sm:$0xf]
        %v845 = vld [vmem:[#allocation2 + $0x424] sm:$0xf]
        %v846 = vld [vmem:[#allocation2 + $0x434] sm:$0xf]
        %v847 = vld [vmem:[#allocation2 + $0x444] sm:$0xf]
        %v848 = vld [vmem:[#allocation2 + $0x454] sm:$0xf]
        %v849 = vld [vmem:[#allocation2 + $0x464] sm:$0xf]
        %v850 = vld [vmem:[#allocation2 + $0x474] sm:$0xf]
        %v851 = vld [vmem:[#allocation2 + $0x484] sm:$0xf]
        %v852 = vld [vmem:[#allocation2 + $0x494] sm:$0xf]
        %v853 = vld [vmem:[#allocation2 + $0x4a4] sm:$0xf]
        %v854 = vld [vmem:[#allocation2 + $0x4b4] sm:$0xf]
        %v855 = vld [vmem:[#allocation2 + $0x4c4] sm:$0xf]
        %v856 = vld [vmem:[#allocation2 + $0x4d4] sm:$0xf]
        %v857 = vld [vmem:[#allocation2 + $0x4e4] sm:$0xf]
        %v858 = vld [vmem:[#allocation2 + $0x4f4] sm:$0xf]
        %v859 = vld [vmem:[#allocation2 + $0x504] sm:$0xf]
        %v860 = vld [vmem:[#allocation2 + $0x514] sm:$0xf]
        %v861 = vld [vmem:[#allocation2 + $0x524] sm:$0xf]
        %v862 = vld [vmem:[#allocation2 + $0x534] sm:$0xf]
        %v863 = vld [vmem:[#allocation2 + $0x544] sm:$0xf]
        %v864 = vld [vmem:[#allocation2 + $0x554] sm:$0xf]
        %v865 = vld [vmem:[#allocation2 + $0x564] sm:$0xf]
        %v866 = vld [vmem:[#allocation2 + $0x574] sm:$0xf]
        %v867 = vld [vmem:[#allocation2 + $0x584] sm:$0xf]
        %v868 = vld [vmem:[#allocation2 + $0x594] sm:$0xf]
        %v869 = vld [vmem:[#allocation2 + $0x5a4] sm:$0xf]
        %v870 = vld [vmem:[#allocation2 + $0x5b4] sm:$0xf]
        %v871 = vld [vmem:[#allocation2 + $0x5c4] sm:$0xf]
        %v872 = vld [vmem:[#allocation2 + $0x5d4] sm:$0xf]
        %v873 = vld [vmem:[#allocation2 + $0x5e4] sm:$0xf]
        %v874 = vld [vmem:[#allocation2 + $0x5f4] sm:$0xf]
        %v875 = vld [vmem:[%s2 + $0x1] sm:$0x1]
        %v877 = vlaneseq
        %v878 = vshrl.u32 %v877, 7
        %v879 = vsub.s32 0, %v878
        %v880 = vrot.slane %v875, %v879
        %v978 = vunpack.c.l.b16 %v779
        %v979 = vunpack.c.l.b16 %v780
        %v980 = vunpack.c.l.b16 %v781
        %v981 = vunpack.c.l.b16 %v782
        %v982 = vunpack.c.l.b16 %v783
        %v983 = vunpack.c.l.b16 %v784
        %v984 = vunpack.c.l.b16 %v785
        %v985 = vunpack.c.l.b16 %v786
        %v986 = vunpack.c.l.b16 %v787
        %v987 = vunpack.c.l.b16 %v788
        %v988 = vunpack.c.l.b16 %v789
        %v989 = vunpack.c.l.b16 %v790
        %v990 = vunpack.c.l.b16 %v791
        %v991 = vunpack.c.l.b16 %v792
        %v992 = vunpack.c.l.b16 %v793
        %v993 = vunpack.c.l.b16 %v794
        %v994 = vunpack.c.l.b16 %v795
        %v995 = vunpack.c.l.b16 %v796
        %v996 = vunpack.c.l.b16 %v797
        %v997 = vunpack.c.l.b16 %v798
        %v998 = vunpack.c.l.b16 %v799
        %v999 = vunpack.c.l.b16 %v800
        %v1000 = vunpack.c.l.b16 %v801
        %v1001 = vunpack.c.l.b16 %v802
        %v1002 = vunpack.c.l.b16 %v803
        %v1003 = vunpack.c.l.b16 %v804
        %v1004 = vunpack.c.l.b16 %v805
        %v1005 = vunpack.c.l.b16 %v806
        %v1006 = vunpack.c.l.b16 %v807
        %v1007 = vunpack.c.l.b16 %v808
        %v1008 = vunpack.c.l.b16 %v809
        %v1009 = vunpack.c.l.b16 %v810
        %v1010 = vunpack.c.l.b16 %v811
        %v1011 = vunpack.c.l.b16 %v812
        %v1012 = vunpack.c.l.b16 %v813
        %v1013 = vunpack.c.l.b16 %v814
        %v1014 = vunpack.c.l.b16 %v815
        %v1015 = vunpack.c.l.b16 %v816
        %v1016 = vunpack.c.l.b16 %v817
        %v1017 = vunpack.c.l.b16 %v818
        %v1018 = vunpack.c.l.b16 %v819
        %v1019 = vunpack.c.l.b16 %v820
        %v1020 = vunpack.c.l.b16 %v821
        %v1021 = vunpack.c.l.b16 %v822
        %v1022 = vunpack.c.l.b16 %v823
        %v1023 = vunpack.c.l.b16 %v824
        %v1024 = vunpack.c.l.b16 %v825
        %v1025 = vunpack.c.l.b16 %v826
        %v1026 = vunpack.c.l.b16 %v827
        %v1027 = vunpack.c.l.b16 %v828
        %v1028 = vunpack.c.l.b16 %v829
        %v1029 = vunpack.c.l.b16 %v830
        %v1030 = vunpack.c.l.b16 %v831
        %v1031 = vunpack.c.l.b16 %v832
        %v1032 = vunpack.c.l.b16 %v833
        %v1033 = vunpack.c.l.b16 %v834
        %v1034 = vunpack.c.l.b16 %v835
        %v1035 = vunpack.c.l.b16 %v836
        %v1036 = vunpack.c.l.b16 %v837
        %v1037 = vunpack.c.l.b16 %v838
        %v1038 = vunpack.c.l.b16 %v839
        %v1039 = vunpack.c.l.b16 %v840
        %v1040 = vunpack.c.l.b16 %v841
        %v1041 = vunpack.c.l.b16 %v842
        %v1042 = vunpack.c.l.b16 %v843
        %v1043 = vunpack.c.l.b16 %v844
        %v1044 = vunpack.c.l.b16 %v845
        %v1045 = vunpack.c.l.b16 %v846
        %v1046 = vunpack.c.l.b16 %v847
        %v1047 = vunpack.c.l.b16 %v848
        %v1048 = vunpack.c.l.b16 %v849
        %v1049 = vunpack.c.l.b16 %v850
        %v1050 = vunpack.c.l.b16 %v851
        %v1051 = vunpack.c.l.b16 %v852
        %v1052 = vunpack.c.l.b16 %v853
        %v1053 = vunpack.c.l.b16 %v854
        %v1054 = vunpack.c.l.b16 %v855
        %v1055 = vunpack.c.l.b16 %v856
        %v1056 = vunpack.c.l.b16 %v857
        %v1057 = vunpack.c.l.b16 %v858
        %v1058 = vunpack.c.l.b16 %v859
        %v1059 = vunpack.c.l.b16 %v860
        %v1060 = vunpack.c.l.b16 %v861
        %v1061 = vunpack.c.l.b16 %v862
        %v1062 = vunpack.c.l.b16 %v863
        %v1063 = vunpack.c.l.b16 %v864
        %v1064 = vunpack.c.l.b16 %v865
        %v1065 = vunpack.c.l.b16 %v866
        %v1066 = vunpack.c.l.b16 %v867
        %v1067 = vunpack.c.l.b16 %v868
        %v1068 = vunpack.c.l.b16 %v869
        %v1069 = vunpack.c.l.b16 %v870
        %v1070 = vunpack.c.l.b16 %v871
        %v1071 = vunpack.c.l.b16 %v872
        %v1072 = vunpack.c.l.b16 %v873
        %v1073 = vunpack.c.l.b16 %v874
        %v1074 = vpack.c.b16 %v979, %v978
        %v1075 = vpack.c.b16 %v981, %v980
        %v1076 = vpack.c.b16 %v983, %v982
        %v1077 = vpack.c.b16 %v985, %v984
        %v1078 = vpack.c.b16 %v987, %v986
        %v1079 = vpack.c.b16 %v989, %v988
        %v1080 = vpack.c.b16 %v991, %v990
        %v1081 = vpack.c.b16 %v993, %v992
        %v1082 = vpack.c.b16 %v995, %v994
        %v1083 = vpack.c.b16 %v997, %v996
        %v1084 = vpack.c.b16 %v999, %v998
        %v1085 = vpack.c.b16 %v1001, %v1000
        %v1086 = vpack.c.b16 %v1003, %v1002
        %v1087 = vpack.c.b16 %v1005, %v1004
        %v1088 = vpack.c.b16 %v1007, %v1006
        %v1089 = vpack.c.b16 %v1009, %v1008
        %v1090 = vpack.c.b16 %v1011, %v1010
        %v1091 = vpack.c.b16 %v1013, %v1012
        %v1092 = vpack.c.b16 %v1015, %v1014
        %v1093 = vpack.c.b16 %v1017, %v1016
        %v1094 = vpack.c.b16 %v1019, %v1018
        %v1095 = vpack.c.b16 %v1021, %v1020
        %v1096 = vpack.c.b16 %v1023, %v1022
        %v1097 = vpack.c.b16 %v1025, %v1024
        %v1098 = vpack.c.b16 %v1027, %v1026
        %v1099 = vpack.c.b16 %v1029, %v1028
        %v1100 = vpack.c.b16 %v1031, %v1030
        %v1101 = vpack.c.b16 %v1033, %v1032
        %v1102 = vpack.c.b16 %v1035, %v1034
        %v1103 = vpack.c.b16 %v1037, %v1036
        %v1104 = vpack.c.b16 %v1039, %v1038
        %v1105 = vpack.c.b16 %v1041, %v1040
        %v1106 = vpack.c.b16 %v1043, %v1042
        %v1107 = vpack.c.b16 %v1045, %v1044
        %v1108 = vpack.c.b16 %v1047, %v1046
        %v1109 = vpack.c.b16 %v1049, %v1048
        %v1110 = vpack.c.b16 %v1051, %v1050
        %v1111 = vpack.c.b16 %v1053, %v1052
        %v1112 = vpack.c.b16 %v1055, %v1054
        %v1113 = vpack.c.b16 %v1057, %v1056
        %v1114 = vpack.c.b16 %v1059, %v1058
        %v1115 = vpack.c.b16 %v1061, %v1060
        %v1116 = vpack.c.b16 %v1063, %v1062
        %v1117 = vpack.c.b16 %v1065, %v1064
        %v1118 = vpack.c.b16 %v1067, %v1066
        %v1119 = vpack.c.b16 %v1069, %v1068
        %v1120 = vpack.c.b16 %v1071, %v1070
        %v1121 = vpack.c.b16 %v1073, %v1072
        %1170 = vmatprep.subr.bf16.mxu0 0
        %1171 = vmatpush1.bf16.msra.mxu0 %v1074
        %1172 = vmatprep.subr.bf16.mxu0 0
        %1173 = vmatpush1.bf16.msra.mxu0 %v1075
        %1174 = vmatprep.subr.bf16.mxu0 0
        %1175 = vmatpush1.bf16.msra.mxu0 %v1076
        %1176 = vmatprep.subr.bf16.mxu0 0
        %1177 = vmatpush1.bf16.msra.mxu0 %v1077
        %1178 = vmatprep.subr.bf16.mxu0 0
        %1179 = vmatpush1.bf16.msra.mxu0 %v1078
        %1180 = vmatprep.subr.bf16.mxu0 0
        %1181 = vmatpush1.bf16.msra.mxu0 %v1079
        %1182 = vmatprep.subr.bf16.mxu0 0
        %1183 = vmatpush1.bf16.msra.mxu0 %v1080
        %1184 = vmatprep.subr.bf16.mxu0 0
        %1185 = vmatpush1.bf16.msra.mxu0 %v1081
        %1186 = vmatprep.subr.bf16.mxu0 0
        %1187 = vmatpush1.bf16.msra.mxu0 %v1082
        %1188 = vmatprep.subr.bf16.mxu0 0
        %1189 = vmatpush1.bf16.msra.mxu0 %v1083
        %1190 = vmatprep.subr.bf16.mxu0 0
        %1191 = vmatpush1.bf16.msra.mxu0 %v1084
        %1192 = vmatprep.subr.bf16.mxu0 0
        %1193 = vmatpush1.bf16.msra.mxu0 %v1085
        %1194 = vmatprep.subr.bf16.mxu0 0
        %1195 = vmatpush1.bf16.msra.mxu0 %v1086
        %1196 = vmatprep.subr.bf16.mxu0 0
        %1197 = vmatpush1.bf16.msra.mxu0 %v1087
        %1198 = vmatprep.subr.bf16.mxu0 0
        %1199 = vmatpush1.bf16.msra.mxu0 %v1088
        %1200 = vmatprep.subr.bf16.mxu0 0
        %1201 = vmatpush1.bf16.msra.mxu0 %v1089
        %1202 = vmatprep.mubr.bf16.mxu0 %v246
        %1203 = vmatmul.mubr.bf16.gmra.mrb[0].mxu0 %v245
        %v1204 = vpop.f32.mrb[0].mxu0
        %v1205 = vadd.f32 %v880, %v1204
        %v1206 = vpop.f32.mrb[0].mxu0
        %v1207 = vpop.f32.mrb[0].mxu0
        %v1208 = vpop.f32.mrb[0].mxu0
        %1209 = vdwg.mxu0
        %1210 = vmatprep.subr.bf16.mxu0 0
        %1211 = vmatpush1.bf16.msra.mxu0 %v1090
        %1212 = vmatprep.subr.bf16.mxu0 0
        %1213 = vmatpush1.bf16.msra.mxu0 %v1091
        %1214 = vmatprep.subr.bf16.mxu0 0
        %1215 = vmatpush1.bf16.msra.mxu0 %v1092
        %1216 = vmatprep.subr.bf16.mxu0 0
        %1217 = vmatpush1.bf16.msra.mxu0 %v1093
        %1218 = vmatprep.subr.bf16.mxu0 0
        %1219 = vmatpush1.bf16.msra.mxu0 %v1094
        %1220 = vmatprep.subr.bf16.mxu0 0
        %1221 = vmatpush1.bf16.msra.mxu0 %v1095
        %1222 = vmatprep.subr.bf16.mxu0 0
        %1223 = vmatpush1.bf16.msra.mxu0 %v1096
        %1224 = vmatprep.subr.bf16.mxu0 0
        %1225 = vmatpush1.bf16.msra.mxu0 %v1097
        %1226 = vmatprep.subr.bf16.mxu0 0
        %1227 = vmatpush1.bf16.msra.mxu0 %v1098
        %1228 = vmatprep.subr.bf16.mxu0 0
        %1229 = vmatpush1.bf16.msra.mxu0 %v1099
        %1230 = vmatprep.subr.bf16.mxu0 0
        %1231 = vmatpush1.bf16.msra.mxu0 %v1100
        %1232 = vmatprep.subr.bf16.mxu0 0
        %1233 = vmatpush1.bf16.msra.mxu0 %v1101
        %1234 = vmatprep.subr.bf16.mxu0 0
        %1235 = vmatpush1.bf16.msra.mxu0 %v1102
        %1236 = vmatprep.subr.bf16.mxu0 0
        %1237 = vmatpush1.bf16.msra.mxu0 %v1103
        %1238 = vmatprep.subr.bf16.mxu0 0
        %1239 = vmatpush1.bf16.msra.mxu0 %v1104
        %1240 = vmatprep.subr.bf16.mxu0 0
        %1241 = vmatpush1.bf16.msra.mxu0 %v1105
        %1242 = vmatprep.mubr.bf16.mxu0 %v248
        %1243 = vmatmul.mubr.bf16.gmra.mrb[0].mxu0 %v247
        %v1244 = vpop.f32.mrb[0].mxu0
        %v1245 = vadd.f32 %v1205, %v1244
        %v1246 = vpop.f32.mrb[0].mxu0
        %v1247 = vpop.f32.mrb[0].mxu0
        %v1248 = vpop.f32.mrb[0].mxu0
        %1249 = vdwg.mxu0
        %1250 = vmatprep.subr.bf16.mxu0 0
        %1251 = vmatpush1.bf16.msra.mxu0 %v1106
        %1252 = vmatprep.subr.bf16.mxu0 0
        %1253 = vmatpush1.bf16.msra.mxu0 %v1107
        %1254 = vmatprep.subr.bf16.mxu0 0
        %1255 = vmatpush1.bf16.msra.mxu0 %v1108
        %1256 = vmatprep.subr.bf16.mxu0 0
        %1257 = vmatpush1.bf16.msra.mxu0 %v1109
        %1258 = vmatprep.subr.bf16.mxu0 0
        %1259 = vmatpush1.bf16.msra.mxu0 %v1110
        %1260 = vmatprep.subr.bf16.mxu0 0
        %1261 = vmatpush1.bf16.msra.mxu0 %v1111
        %1262 = vmatprep.subr.bf16.mxu0 0
        %1263 = vmatpush1.bf16.msra.mxu0 %v1112
        %1264 = vmatprep.subr.bf16.mxu0 0
        %1265 = vmatpush1.bf16.msra.mxu0 %v1113
        %1266 = vmatprep.subr.bf16.mxu0 0
        %1267 = vmatpush1.bf16.msra.mxu0 %v1114
        %1268 = vmatprep.subr.bf16.mxu0 0
        %1269 = vmatpush1.bf16.msra.mxu0 %v1115
        %1270 = vmatprep.subr.bf16.mxu0 0
        %1271 = vmatpush1.bf16.msra.mxu0 %v1116
        %1272 = vmatprep.subr.bf16.mxu0 0
        %1273 = vmatpush1.bf16.msra.mxu0 %v1117
        %1274 = vmatprep.subr.bf16.mxu0 0
        %1275 = vmatpush1.bf16.msra.mxu0 %v1118
        %1276 = vmatprep.subr.bf16.mxu0 0
        %1277 = vmatpush1.bf16.msra.mxu0 %v1119
        %1278 = vmatprep.subr.bf16.mxu0 0
        %1279 = vmatpush1.bf16.msra.mxu0 %v1120
        %1280 = vmatprep.subr.bf16.mxu0 0
        %1281 = vmatpush1.bf16.msra.mxu0 %v1121
        %1282 = vmatprep.mubr.bf16.mxu0 %v250
        %1283 = vmatmul.mubr.bf16.gmra.mrb[0].mxu0 %v249
        %v1284 = vpop.f32.mrb[0].mxu0
        %v1285 = vadd.f32 %v1245, %v1284
        %v1286 = vpop.f32.mrb[0].mxu0
        %v1287 = vpop.f32.mrb[0].mxu0
        %v1288 = vpop.f32.mrb[0].mxu0
        %1289 = vdwg.mxu0
        %v1290 = vpack.c.bf16 %v1285, %v1285
        %v1291 = vld [vmem:[%s3 + $0x40] sm:$0xf]
        %v1292 = vld [vmem:[%s3 + $0x44] sm:$0xf]
        %v1293 = vld [vmem:[%s3 + $0x48] sm:$0xf]
        %v1294 = vld [vmem:[%s3 + $0x4c] sm:$0xf]
        %v1295 = vld [vmem:[%s3 + $0x50] sm:$0xf]
        %v1296 = vld [vmem:[%s3 + $0x54] sm:$0xf]
        %v1297 = vld [vmem:[%s3 + $0x58] sm:$0xf]
        %v1298 = vld [vmem:[%s3 + $0x5c] sm:$0xf]
        %v1299 = vld [vmem:[%s3 + $0x60] sm:$0xf]
        %v1300 = vld [vmem:[%s3 + $0x64] sm:$0xf]
        %v1301 = vld [vmem:[%s3 + $0x68] sm:$0xf]
        %v1302 = vld [vmem:[%s3 + $0x6c] sm:$0xf]
        %v1303 = vld [vmem:[%s3 + $0x70] sm:$0xf]
        %v1304 = vld [vmem:[%s3 + $0x74] sm:$0xf]
        %v1305 = vld [vmem:[%s3 + $0x78] sm:$0xf]
        %v1306 = vld [vmem:[%s3 + $0x7c] sm:$0xf]
        %v1323 = vunpack.c.l.b16 %v1291
        %v1324 = vunpack.c.l.b16 %v1292
        %v1325 = vunpack.c.l.b16 %v1293
        %v1326 = vunpack.c.l.b16 %v1294
        %v1327 = vunpack.c.l.b16 %v1295
        %v1328 = vunpack.c.l.b16 %v1296
        %v1329 = vunpack.c.l.b16 %v1297
        %v1330 = vunpack.c.l.b16 %v1298
        %v1331 = vunpack.c.l.b16 %v1299
        %v1332 = vunpack.c.l.b16 %v1300
        %v1333 = vunpack.c.l.b16 %v1301
        %v1334 = vunpack.c.l.b16 %v1302
        %v1335 = vunpack.c.l.b16 %v1303
        %v1336 = vunpack.c.l.b16 %v1304
        %v1337 = vunpack.c.l.b16 %v1305
        %v1338 = vunpack.c.l.b16 %v1306
        %v1339 = vpack.c.b16 %v1324, %v1323
        %v1340 = vpack.c.b16 %v1326, %v1325
        %v1341 = vpack.c.b16 %v1328, %v1327
        %v1342 = vpack.c.b16 %v1330, %v1329
        %v1343 = vpack.c.b16 %v1332, %v1331
        %v1344 = vpack.c.b16 %v1334, %v1333
        %v1345 = vpack.c.b16 %v1336, %v1335
        %v1346 = vpack.c.b16 %v1338, %v1337
        %1355 = vmatprep.subr.bf16.mxu0 0
        %1356 = vmatpush1.bf16.msra.mxu0 %v1339
        %1357 = vmatprep.subr.bf16.mxu0 0
        %1358 = vmatpush1.bf16.msra.mxu0 %v1340
        %1359 = vmatprep.subr.bf16.mxu0 0
        %1360 = vmatpush1.bf16.msra.mxu0 %v1341
        %1361 = vmatprep.subr.bf16.mxu0 0
        %1362 = vmatpush1.bf16.msra.mxu0 %v1342
        %1363 = vmatprep.subr.bf16.mxu0 0
        %1364 = vmatpush1.bf16.msra.mxu0 %v1343
        %1365 = vmatprep.subr.bf16.mxu0 0
        %1366 = vmatpush1.bf16.msra.mxu0 %v1344
        %1367 = vmatprep.subr.bf16.mxu0 0
        %1368 = vmatpush1.bf16.msra.mxu0 %v1345
        %1369 = vmatprep.subr.bf16.mxu0 0
        %1370 = vmatpush1.bf16.msra.mxu0 %v1346
        %1371 = vmatprep.subr.bf16.mxu0 0
        %1372 = vmatpush1.bf16.msra.mxu0 0
        %1373 = vmatprep.subr.bf16.mxu0 0
        %1374 = vmatpush1.bf16.msra.mxu0 0
        %1375 = vmatprep.subr.bf16.mxu0 0
        %1376 = vmatpush1.bf16.msra.mxu0 0
        %1377 = vmatprep.subr.bf16.mxu0 0
        %1378 = vmatpush1.bf16.msra.mxu0 0
        %1379 = vmatprep.subr.bf16.mxu0 0
        %1380 = vmatpush1.bf16.msra.mxu0 0
        %1381 = vmatprep.subr.bf16.mxu0 0
        %1382 = vmatpush1.bf16.msra.mxu0 0
        %1383 = vmatprep.subr.bf16.mxu0 0
        %1384 = vmatpush1.bf16.msra.mxu0 0
        %1385 = vmatprep.subr.bf16.mxu0 0
        %1386 = vmatpush1.bf16.msra.mxu0 0
        %1387 = vmatprep.mubr.bf16.mxu0 0
        %1388 = vmatmul.mubr.bf16.gmra.mrb[0].mxu0 %v1290
        %v1389 = vpop.f32.mrb[0].mxu0
        %v1390 = vadd.f32 0.0, %v1389
        %v1391 = vpop.f32.mrb[0].mxu0
        %v1392 = vpop.f32.mrb[0].mxu0
        %v1393 = vpop.f32.mrb[0].mxu0
        %1394 = vdwg.mxu0
        %v1411 = vunpack.c.l.b16 %v763
        %v1412 = vunpack.c.l.b16 %v764
        %v1413 = vunpack.c.l.b16 %v765
        %v1414 = vunpack.c.l.b16 %v766
        %v1415 = vunpack.c.l.b16 %v767
        %v1416 = vunpack.c.l.b16 %v768
        %v1417 = vunpack.c.l.b16 %v769
        %v1418 = vunpack.c.l.b16 %v770
        %v1419 = vunpack.c.l.b16 %v771
        %v1420 = vunpack.c.l.b16 %v772
        %v1421 = vunpack.c.l.b16 %v773
        %v1422 = vunpack.c.l.b16 %v774
        %v1423 = vunpack.c.l.b16 %v775
        %v1424 = vunpack.c.l.b16 %v776
        %v1425 = vunpack.c.l.b16 %v777
        %v1426 = vunpack.c.l.b16 %v778
        %v1427 = vpack.c.b16 %v1412, %v1411
        %v1428 = vpack.c.b16 %v1414, %v1413
        %v1429 = vpack.c.b16 %v1416, %v1415
        %v1430 = vpack.c.b16 %v1418, %v1417
        %v1431 = vpack.c.b16 %v1420, %v1419
        %v1432 = vpack.c.b16 %v1422, %v1421
        %v1433 = vpack.c.b16 %v1424, %v1423
        %v1434 = vpack.c.b16 %v1426, %v1425
        %1443 = vmatprep.subr.bf16.mxu0 0
        %1444 = vmatpush1.bf16.msra.mxu0 %v1427
        %1445 = vmatprep.subr.bf16.mxu0 0
        %1446 = vmatpush1.bf16.msra.mxu0 %v1428
        %1447 = vmatprep.subr.bf16.mxu0 0
        %1448 = vmatpush1.bf16.msra.mxu0 %v1429
        %1449 = vmatprep.subr.bf16.mxu0 0
        %1450 = vmatpush1.bf16.msra.mxu0 %v1430
        %1451 = vmatprep.subr.bf16.mxu0 0
        %1452 = vmatpush1.bf16.msra.mxu0 %v1431
        %1453 = vmatprep.subr.bf16.mxu0 0
        %1454 = vmatpush1.bf16.msra.mxu0 %v1432
        %1455 = vmatprep.subr.bf16.mxu0 0
        %1456 = vmatpush1.bf16.msra.mxu0 %v1433
        %1457 = vmatprep.subr.bf16.mxu0 0
        %1458 = vmatpush1.bf16.msra.mxu0 %v1434
        %1459 = vmatprep.subr.bf16.mxu0 0
        %1460 = vmatpush1.bf16.msra.mxu0 0
        %1461 = vmatprep.subr.bf16.mxu0 0
        %1462 = vmatpush1.bf16.msra.mxu0 0
        %1463 = vmatprep.subr.bf16.mxu0 0
        %1464 = vmatpush1.bf16.msra.mxu0 0
        %1465 = vmatprep.subr.bf16.mxu0 0
        %1466 = vmatpush1.bf16.msra.mxu0 0
        %1467 = vmatprep.subr.bf16.mxu0 0
        %1468 = vmatpush1.bf16.msra.mxu0 0
        %1469 = vmatprep.subr.bf16.mxu0 0
        %1470 = vmatpush1.bf16.msra.mxu0 0
        %1471 = vmatprep.subr.bf16.mxu0 0
        %1472 = vmatpush1.bf16.msra.mxu0 0
        %1473 = vmatprep.subr.bf16.mxu0 0
        %1474 = vmatpush1.bf16.msra.mxu0 0
        %1475 = vmatprep.mubr.bf16.mxu0 0
        %1476 = vmatmul.mubr.bf16.gmra.mrb[0].mxu0 %v762
        %v1477 = vpop.f32.mrb[0].mxu0
        %v1478 = vadd.f32 %v1390, %v1477
        %v1479 = vpop.f32.mrb[0].mxu0
        %v1480 = vpop.f32.mrb[0].mxu0
        %v1481 = vpop.f32.mrb[0].mxu0
        %1482 = vdwg.mxu0
        %v1483 = vld [vmem:[#allocation2 + $0x8] sm:$0xf]
        %v1484 = vld [vmem:[#allocation2 + $0x18] sm:$0xf]
        %v1485 = vld [vmem:[#allocation2 + $0x28] sm:$0xf]
        %v1486 = vld [vmem:[#allocation2 + $0x38] sm:$0xf]
        %v1487 = vld [vmem:[#allocation2 + $0x48] sm:$0xf]
        %v1488 = vld [vmem:[#allocation2 + $0x58] sm:$0xf]
        %v1489 = vld [vmem:[#allocation2 + $0x68] sm:$0xf]
        %v1490 = vld [vmem:[#allocation2 + $0x78] sm:$0xf]
        %v1491 = vld [vmem:[#allocation2 + $0x88] sm:$0xf]
        %v1492 = vld [vmem:[#allocation2 + $0x98] sm:$0xf]
        %v1493 = vld [vmem:[#allocation2 + $0xa8] sm:$0xf]
        %v1494 = vld [vmem:[#allocation2 + $0xb8] sm:$0xf]
        %v1495 = vld [vmem:[#allocation2 + $0xc8] sm:$0xf]
        %v1496 = vld [vmem:[#allocation2 + $0xd8] sm:$0xf]
        %v1497 = vld [vmem:[#allocation2 + $0xe8] sm:$0xf]
        %v1498 = vld [vmem:[#allocation2 + $0xf8] sm:$0xf]
        %v1499 = vld [vmem:[#allocation2 + $0x108] sm:$0xf]
        %v1500 = vld [vmem:[#allocation2 + $0x118] sm:$0xf]
        %v1501 = vld [vmem:[#allocation2 + $0x128] sm:$0xf]
        %v1502 = vld [vmem:[#allocation2 + $0x138] sm:$0xf]
        %v1503 = vld [vmem:[#allocation2 + $0x148] sm:$0xf]
        %v1504 = vld [vmem:[#allocation2 + $0x158] sm:$0xf]
        %v1505 = vld [vmem:[#allocation2 + $0x168] sm:$0xf]
        %v1506 = vld [vmem:[#allocation2 + $0x178] sm:$0xf]
        %v1507 = vld [vmem:[#allocation2 + $0x188] sm:$0xf]
        %v1508 = vld [vmem:[#allocation2 + $0x198] sm:$0xf]
        %v1509 = vld [vmem:[#allocation2 + $0x1a8] sm:$0xf]
        %v1510 = vld [vmem:[#allocation2 + $0x1b8] sm:$0xf]
        %v1511 = vld [vmem:[#allocation2 + $0x1c8] sm:$0xf]
        %v1512 = vld [vmem:[#allocation2 + $0x1d8] sm:$0xf]
        %v1513 = vld [vmem:[#allocation2 + $0x1e8] sm:$0xf]
        %v1514 = vld [vmem:[#allocation2 + $0x1f8] sm:$0xf]
        %v1515 = vld [vmem:[#allocation2 + $0x208] sm:$0xf]
        %v1516 = vld [vmem:[#allocation2 + $0x218] sm:$0xf]
        %v1517 = vld [vmem:[#allocation2 + $0x228] sm:$0xf]
        %v1518 = vld [vmem:[#allocation2 + $0x238] sm:$0xf]
        %v1519 = vld [vmem:[#allocation2 + $0x248] sm:$0xf]
        %v1520 = vld [vmem:[#allocation2 + $0x258] sm:$0xf]
        %v1521 = vld [vmem:[#allocation2 + $0x268] sm:$0xf]
        %v1522 = vld [vmem:[#allocation2 + $0x278] sm:$0xf]
        %v1523 = vld [vmem:[#allocation2 + $0x288] sm:$0xf]
        %v1524 = vld [vmem:[#allocation2 + $0x298] sm:$0xf]
        %v1525 = vld [vmem:[#allocation2 + $0x2a8] sm:$0xf]
        %v1526 = vld [vmem:[#allocation2 + $0x2b8] sm:$0xf]
        %v1527 = vld [vmem:[#allocation2 + $0x2c8] sm:$0xf]
        %v1528 = vld [vmem:[#allocation2 + $0x2d8] sm:$0xf]
        %v1529 = vld [vmem:[#allocation2 + $0x2e8] sm:$0xf]
        %v1530 = vld [vmem:[#allocation2 + $0x2f8] sm:$0xf]
        %v1531 = vld [vmem:[#allocation2 + $0x308] sm:$0xf]
        %v1532 = vld [vmem:[#allocation2 + $0x318] sm:$0xf]
        %v1533 = vld [vmem:[#allocation2 + $0x328] sm:$0xf]
        %v1534 = vld [vmem:[#allocation2 + $0x338] sm:$0xf]
        %v1535 = vld [vmem:[#allocation2 + $0x348] sm:$0xf]
        %v1536 = vld [vmem:[#allocation2 + $0x358] sm:$0xf]
        %v1537 = vld [vmem:[#allocation2 + $0x368] sm:$0xf]
        %v1538 = vld [vmem:[#allocation2 + $0x378] sm:$0xf]
        %v1539 = vld [vmem:[#allocation2 + $0x388] sm:$0xf]
        %v1540 = vld [vmem:[#allocation2 + $0x398] sm:$0xf]
        %v1541 = vld [vmem:[#allocation2 + $0x3a8] sm:$0xf]
        %v1542 = vld [vmem:[#allocation2 + $0x3b8] sm:$0xf]
        %v1543 = vld [vmem:[#allocation2 + $0x3c8] sm:$0xf]
        %v1544 = vld [vmem:[#allocation2 + $0x3d8] sm:$0xf]
        %v1545 = vld [vmem:[#allocation2 + $0x3e8] sm:$0xf]
        %v1546 = vld [vmem:[#allocation2 + $0x3f8] sm:$0xf]
        %v1547 = vld [vmem:[#allocation2 + $0x408] sm:$0xf]
        %v1548 = vld [vmem:[#allocation2 + $0x418] sm:$0xf]
        %v1549 = vld [vmem:[#allocation2 + $0x428] sm:$0xf]
        %v1550 = vld [vmem:[#allocation2 + $0x438] sm:$0xf]
        %v1551 = vld [vmem:[#allocation2 + $0x448] sm:$0xf]
        %v1552 = vld [vmem:[#allocation2 + $0x458] sm:$0xf]
        %v1553 = vld [vmem:[#allocation2 + $0x468] sm:$0xf]
        %v1554 = vld [vmem:[#allocation2 + $0x478] sm:$0xf]
        %v1555 = vld [vmem:[#allocation2 + $0x488] sm:$0xf]
        %v1556 = vld [vmem:[#allocation2 + $0x498] sm:$0xf]
        %v1557 = vld [vmem:[#allocation2 + $0x4a8] sm:$0xf]
        %v1558 = vld [vmem:[#allocation2 + $0x4b8] sm:$0xf]
        %v1559 = vld [vmem:[#allocation2 + $0x4c8] sm:$0xf]
        %v1560 = vld [vmem:[#allocation2 + $0x4d8] sm:$0xf]
        %v1561 = vld [vmem:[#allocation2 + $0x4e8] sm:$0xf]
        %v1562 = vld [vmem:[#allocation2 + $0x4f8] sm:$0xf]
        %v1563 = vld [vmem:[#allocation2 + $0x508] sm:$0xf]
        %v1564 = vld [vmem:[#allocation2 + $0x518] sm:$0xf]
        %v1565 = vld [vmem:[#allocation2 + $0x528] sm:$0xf]
        %v1566 = vld [vmem:[#allocation2 + $0x538] sm:$0xf]
        %v1567 = vld [vmem:[#allocation2 + $0x548] sm:$0xf]
        %v1568 = vld [vmem:[#allocation2 + $0x558] sm:$0xf]
        %v1569 = vld [vmem:[#allocation2 + $0x568] sm:$0xf]
        %v1570 = vld [vmem:[#allocation2 + $0x578] sm:$0xf]
        %v1571 = vld [vmem:[#allocation2 + $0x588] sm:$0xf]
        %v1572 = vld [vmem:[#allocation2 + $0x598] sm:$0xf]
        %v1573 = vld [vmem:[#allocation2 + $0x5a8] sm:$0xf]
        %v1574 = vld [vmem:[#allocation2 + $0x5b8] sm:$0xf]
        %v1575 = vld [vmem:[#allocation2 + $0x5c8] sm:$0xf]
        %v1576 = vld [vmem:[#allocation2 + $0x5d8] sm:$0xf]
        %v1577 = vld [vmem:[#allocation2 + $0x5e8] sm:$0xf]
        %v1578 = vld [vmem:[#allocation2 + $0x5f8] sm:$0xf]
        %v1579 = vld [vmem:[%s2 + $0x2] sm:$0x1]
        %v1581 = vlaneseq
        %v1582 = vshrl.u32 %v1581, 7
        %v1583 = vsub.s32 0, %v1582
        %v1584 = vrot.slane %v1579, %v1583
        %v1682 = vunpack.c.l.b16 %v1483
        %v1683 = vunpack.c.l.b16 %v1484
        %v1684 = vunpack.c.l.b16 %v1485
        %v1685 = vunpack.c.l.b16 %v1486
        %v1686 = vunpack.c.l.b16 %v1487
        %v1687 = vunpack.c.l.b16 %v1488
        %v1688 = vunpack.c.l.b16 %v1489
        %v1689 = vunpack.c.l.b16 %v1490
        %v1690 = vunpack.c.l.b16 %v1491
        %v1691 = vunpack.c.l.b16 %v1492
        %v1692 = vunpack.c.l.b16 %v1493
        %v1693 = vunpack.c.l.b16 %v1494
        %v1694 = vunpack.c.l.b16 %v1495
        %v1695 = vunpack.c.l.b16 %v1496
        %v1696 = vunpack.c.l.b16 %v1497
        %v1697 = vunpack.c.l.b16 %v1498
        %v1698 = vunpack.c.l.b16 %v1499
        %v1699 = vunpack.c.l.b16 %v1500
        %v1700 = vunpack.c.l.b16 %v1501
        %v1701 = vunpack.c.l.b16 %v1502
        %v1702 = vunpack.c.l.b16 %v1503
        %v1703 = vunpack.c.l.b16 %v1504
        %v1704 = vunpack.c.l.b16 %v1505
        %v1705 = vunpack.c.l.b16 %v1506
        %v1706 = vunpack.c.l.b16 %v1507
        %v1707 = vunpack.c.l.b16 %v1508
        %v1708 = vunpack.c.l.b16 %v1509
        %v1709 = vunpack.c.l.b16 %v1510
        %v1710 = vunpack.c.l.b16 %v1511
        %v1711 = vunpack.c.l.b16 %v1512
        %v1712 = vunpack.c.l.b16 %v1513
        %v1713 = vunpack.c.l.b16 %v1514
        %v1714 = vunpack.c.l.b16 %v1515
        %v1715 = vunpack.c.l.b16 %v1516
        %v1716 = vunpack.c.l.b16 %v1517
        %v1717 = vunpack.c.l.b16 %v1518
        %v1718 = vunpack.c.l.b16 %v1519
        %v1719 = vunpack.c.l.b16 %v1520
        %v1720 = vunpack.c.l.b16 %v1521
        %v1721 = vunpack.c.l.b16 %v1522
        %v1722 = vunpack.c.l.b16 %v1523
        %v1723 = vunpack.c.l.b16 %v1524
        %v1724 = vunpack.c.l.b16 %v1525
        %v1725 = vunpack.c.l.b16 %v1526
        %v1726 = vunpack.c.l.b16 %v1527
        %v1727 = vunpack.c.l.b16 %v1528
        %v1728 = vunpack.c.l.b16 %v1529
        %v1729 = vunpack.c.l.b16 %v1530
        %v1730 = vunpack.c.l.b16 %v1531
        %v1731 = vunpack.c.l.b16 %v1532
        %v1732 = vunpack.c.l.b16 %v1533
        %v1733 = vunpack.c.l.b16 %v1534
        %v1734 = vunpack.c.l.b16 %v1535
        %v1735 = vunpack.c.l.b16 %v1536
        %v1736 = vunpack.c.l.b16 %v1537
        %v1737 = vunpack.c.l.b16 %v1538
        %v1738 = vunpack.c.l.b16 %v1539
        %v1739 = vunpack.c.l.b16 %v1540
        %v1740 = vunpack.c.l.b16 %v1541
        %v1741 = vunpack.c.l.b16 %v1542
        %v1742 = vunpack.c.l.b16 %v1543
        %v1743 = vunpack.c.l.b16 %v1544
        %v1744 = vunpack.c.l.b16 %v1545
        %v1745 = vunpack.c.l.b16 %v1546
        %v1746 = vunpack.c.l.b16 %v1547
        %v1747 = vunpack.c.l.b16 %v1548
        %v1748 = vunpack.c.l.b16 %v1549
        %v1749 = vunpack.c.l.b16 %v1550
        %v1750 = vunpack.c.l.b16 %v1551
        %v1751 = vunpack.c.l.b16 %v1552
        %v1752 = vunpack.c.l.b16 %v1553
        %v1753 = vunpack.c.l.b16 %v1554
        %v1754 = vunpack.c.l.b16 %v1555
        %v1755 = vunpack.c.l.b16 %v1556
        %v1756 = vunpack.c.l.b16 %v1557
        %v1757 = vunpack.c.l.b16 %v1558
        %v1758 = vunpack.c.l.b16 %v1559
        %v1759 = vunpack.c.l.b16 %v1560
        %v1760 = vunpack.c.l.b16 %v1561
        %v1761 = vunpack.c.l.b16 %v1562
        %v1762 = vunpack.c.l.b16 %v1563
        %v1763 = vunpack.c.l.b16 %v1564
        %v1764 = vunpack.c.l.b16 %v1565
        %v1765 = vunpack.c.l.b16 %v1566
        %v1766 = vunpack.c.l.b16 %v1567
        %v1767 = vunpack.c.l.b16 %v1568
        %v1768 = vunpack.c.l.b16 %v1569
        %v1769 = vunpack.c.l.b16 %v1570
        %v1770 = vunpack.c.l.b16 %v1571
        %v1771 = vunpack.c.l.b16 %v1572
        %v1772 = vunpack.c.l.b16 %v1573
        %v1773 = vunpack.c.l.b16 %v1574
        %v1774 = vunpack.c.l.b16 %v1575
        %v1775 = vunpack.c.l.b16 %v1576
        %v1776 = vunpack.c.l.b16 %v1577
        %v1777 = vunpack.c.l.b16 %v1578
        %v1778 = vpack.c.b16 %v1683, %v1682
        %v1779 = vpack.c.b16 %v1685, %v1684
        %v1780 = vpack.c.b16 %v1687, %v1686
        %v1781 = vpack.c.b16 %v1689, %v1688
        %v1782 = vpack.c.b16 %v1691, %v1690
        %v1783 = vpack.c.b16 %v1693, %v1692
        %v1784 = vpack.c.b16 %v1695, %v1694
        %v1785 = vpack.c.b16 %v1697, %v1696
        %v1786 = vpack.c.b16 %v1699, %v1698
        %v1787 = vpack.c.b16 %v1701, %v1700
        %v1788 = vpack.c.b16 %v1703, %v1702
        %v1789 = vpack.c.b16 %v1705, %v1704
        %v1790 = vpack.c.b16 %v1707, %v1706
        %v1791 = vpack.c.b16 %v1709, %v1708
        %v1792 = vpack.c.b16 %v1711, %v1710
        %v1793 = vpack.c.b16 %v1713, %v1712
        %v1794 = vpack.c.b16 %v1715, %v1714
        %v1795 = vpack.c.b16 %v1717, %v1716
        %v1796 = vpack.c.b16 %v1719, %v1718
        %v1797 = vpack.c.b16 %v1721, %v1720
        %v1798 = vpack.c.b16 %v1723, %v1722
        %v1799 = vpack.c.b16 %v1725, %v1724
        %v1800 = vpack.c.b16 %v1727, %v1726
        %v1801 = vpack.c.b16 %v1729, %v1728
        %v1802 = vpack.c.b16 %v1731, %v1730
        %v1803 = vpack.c.b16 %v1733, %v1732
        %v1804 = vpack.c.b16 %v1735, %v1734
        %v1805 = vpack.c.b16 %v1737, %v1736
        %v1806 = vpack.c.b16 %v1739, %v1738
        %v1807 = vpack.c.b16 %v1741, %v1740
        %v1808 = vpack.c.b16 %v1743, %v1742
        %v1809 = vpack.c.b16 %v1745, %v1744
        %v1810 = vpack.c.b16 %v1747, %v1746
        %v1811 = vpack.c.b16 %v1749, %v1748
        %v1812 = vpack.c.b16 %v1751, %v1750
        %v1813 = vpack.c.b16 %v1753, %v1752
        %v1814 = vpack.c.b16 %v1755, %v1754
        %v1815 = vpack.c.b16 %v1757, %v1756
        %v1816 = vpack.c.b16 %v1759, %v1758
        %v1817 = vpack.c.b16 %v1761, %v1760
        %v1818 = vpack.c.b16 %v1763, %v1762
        %v1819 = vpack.c.b16 %v1765, %v1764
        %v1820 = vpack.c.b16 %v1767, %v1766
        %v1821 = vpack.c.b16 %v1769, %v1768
        %v1822 = vpack.c.b16 %v1771, %v1770
        %v1823 = vpack.c.b16 %v1773, %v1772
        %v1824 = vpack.c.b16 %v1775, %v1774
        %v1825 = vpack.c.b16 %v1777, %v1776
        %1874 = vmatprep.subr.bf16.mxu0 0
        %1875 = vmatpush1.bf16.msra.mxu0 %v1778
        %1876 = vmatprep.subr.bf16.mxu0 0
        %1877 = vmatpush1.bf16.msra.mxu0 %v1779
        %1878 = vmatprep.subr.bf16.mxu0 0
        %1879 = vmatpush1.bf16.msra.mxu0 %v1780
        %1880 = vmatprep.subr.bf16.mxu0 0
        %1881 = vmatpush1.bf16.msra.mxu0 %v1781
        %1882 = vmatprep.subr.bf16.mxu0 0
        %1883 = vmatpush1.bf16.msra.mxu0 %v1782
        %1884 = vmatprep.subr.bf16.mxu0 0
        %1885 = vmatpush1.bf16.msra.mxu0 %v1783
        %1886 = vmatprep.subr.bf16.mxu0 0
        %1887 = vmatpush1.bf16.msra.mxu0 %v1784
        %1888 = vmatprep.subr.bf16.mxu0 0
        %1889 = vmatpush1.bf16.msra.mxu0 %v1785
        %1890 = vmatprep.subr.bf16.mxu0 0
        %1891 = vmatpush1.bf16.msra.mxu0 %v1786
        %1892 = vmatprep.subr.bf16.mxu0 0
        %1893 = vmatpush1.bf16.msra.mxu0 %v1787
        %1894 = vmatprep.subr.bf16.mxu0 0
        %1895 = vmatpush1.bf16.msra.mxu0 %v1788
        %1896 = vmatprep.subr.bf16.mxu0 0
        %1897 = vmatpush1.bf16.msra.mxu0 %v1789
        %1898 = vmatprep.subr.bf16.mxu0 0
        %1899 = vmatpush1.bf16.msra.mxu0 %v1790
        %1900 = vmatprep.subr.bf16.mxu0 0
        %1901 = vmatpush1.bf16.msra.mxu0 %v1791
        %1902 = vmatprep.subr.bf16.mxu0 0
        %1903 = vmatpush1.bf16.msra.mxu0 %v1792
        %1904 = vmatprep.subr.bf16.mxu0 0
        %1905 = vmatpush1.bf16.msra.mxu0 %v1793
        %1906 = vmatprep.mubr.bf16.mxu0 %v246
        %1907 = vmatmul.mubr.bf16.gmra.mrb[0].mxu0 %v245
        %v1908 = vpop.f32.mrb[0].mxu0
        %v1909 = vadd.f32 %v1584, %v1908
        %v1910 = vpop.f32.mrb[0].mxu0
        %v1911 = vpop.f32.mrb[0].mxu0
        %v1912 = vpop.f32.mrb[0].mxu0
        %1913 = vdwg.mxu0
        %1914 = vmatprep.subr.bf16.mxu0 0
        %1915 = vmatpush1.bf16.msra.mxu0 %v1794
        %1916 = vmatprep.subr.bf16.mxu0 0
        %1917 = vmatpush1.bf16.msra.mxu0 %v1795
        %1918 = vmatprep.subr.bf16.mxu0 0
        %1919 = vmatpush1.bf16.msra.mxu0 %v1796
        %1920 = vmatprep.subr.bf16.mxu0 0
        %1921 = vmatpush1.bf16.msra.mxu0 %v1797
        %1922 = vmatprep.subr.bf16.mxu0 0
        %1923 = vmatpush1.bf16.msra.mxu0 %v1798
        %1924 = vmatprep.subr.bf16.mxu0 0
        %1925 = vmatpush1.bf16.msra.mxu0 %v1799
        %1926 = vmatprep.subr.bf16.mxu0 0
        %1927 = vmatpush1.bf16.msra.mxu0 %v1800
        %1928 = vmatprep.subr.bf16.mxu0 0
        %1929 = vmatpush1.bf16.msra.mxu0 %v1801
        %1930 = vmatprep.subr.bf16.mxu0 0
        %1931 = vmatpush1.bf16.msra.mxu0 %v1802
        %1932 = vmatprep.subr.bf16.mxu0 0
        %1933 = vmatpush1.bf16.msra.mxu0 %v1803
        %1934 = vmatprep.subr.bf16.mxu0 0
        %1935 = vmatpush1.bf16.msra.mxu0 %v1804
        %1936 = vmatprep.subr.bf16.mxu0 0
        %1937 = vmatpush1.bf16.msra.mxu0 %v1805
        %1938 = vmatprep.subr.bf16.mxu0 0
        %1939 = vmatpush1.bf16.msra.mxu0 %v1806
        %1940 = vmatprep.subr.bf16.mxu0 0
        %1941 = vmatpush1.bf16.msra.mxu0 %v1807
        %1942 = vmatprep.subr.bf16.mxu0 0
        %1943 = vmatpush1.bf16.msra.mxu0 %v1808
        %1944 = vmatprep.subr.bf16.mxu0 0
        %1945 = vmatpush1.bf16.msra.mxu0 %v1809
        %1946 = vmatprep.mubr.bf16.mxu0 %v248
        %1947 = vmatmul.mubr.bf16.gmra.mrb[0].mxu0 %v247
        %v1948 = vpop.f32.mrb[0].mxu0
        %v1949 = vadd.f32 %v1909, %v1948
        %v1950 = vpop.f32.mrb[0].mxu0
        %v1951 = vpop.f32.mrb[0].mxu0
        %v1952 = vpop.f32.mrb[0].mxu0
        %1953 = vdwg.mxu0
        %1954 = vmatprep.subr.bf16.mxu0 0
        %1955 = vmatpush1.bf16.msra.mxu0 %v1810
        %1956 = vmatprep.subr.bf16.mxu0 0
        %1957 = vmatpush1.bf16.msra.mxu0 %v1811
        %1958 = vmatprep.subr.bf16.mxu0 0
        %1959 = vmatpush1.bf16.msra.mxu0 %v1812
        %1960 = vmatprep.subr.bf16.mxu0 0
        %1961 = vmatpush1.bf16.msra.mxu0 %v1813
        %1962 = vmatprep.subr.bf16.mxu0 0
        %1963 = vmatpush1.bf16.msra.mxu0 %v1814
        %1964 = vmatprep.subr.bf16.mxu0 0
        %1965 = vmatpush1.bf16.msra.mxu0 %v1815
        %1966 = vmatprep.subr.bf16.mxu0 0
        %1967 = vmatpush1.bf16.msra.mxu0 %v1816
        %1968 = vmatprep.subr.bf16.mxu0 0
        %1969 = vmatpush1.bf16.msra.mxu0 %v1817
        %1970 = vmatprep.subr.bf16.mxu0 0
        %1971 = vmatpush1.bf16.msra.mxu0 %v1818
        %1972 = vmatprep.subr.bf16.mxu0 0
        %1973 = vmatpush1.bf16.msra.mxu0 %v1819
        %1974 = vmatprep.subr.bf16.mxu0 0
        %1975 = vmatpush1.bf16.msra.mxu0 %v1820
        %1976 = vmatprep.subr.bf16.mxu0 0
        %1977 = vmatpush1.bf16.msra.mxu0 %v1821
        %1978 = vmatprep.subr.bf16.mxu0 0
        %1979 = vmatpush1.bf16.msra.mxu0 %v1822
        %1980 = vmatprep.subr.bf16.mxu0 0
        %1981 = vmatpush1.bf16.msra.mxu0 %v1823
        %1982 = vmatprep.subr.bf16.mxu0 0
        %1983 = vmatpush1.bf16.msra.mxu0 %v1824
        %1984 = vmatprep.subr.bf16.mxu0 0
        %1985 = vmatpush1.bf16.msra.mxu0 %v1825
        %1986 = vmatprep.mubr.bf16.mxu0 %v250
        %1987 = vmatmul.mubr.bf16.gmra.mrb[0].mxu0 %v249
        %v1988 = vpop.f32.mrb[0].mxu0
        %v1989 = vadd.f32 %v1949, %v1988
        %v1990 = vpop.f32.mrb[0].mxu0
        %v1991 = vpop.f32.mrb[0].mxu0
        %v1992 = vpop.f32.mrb[0].mxu0
        %1993 = vdwg.mxu0
        %v1994 = vpack.c.bf16 %v1989, %v1989
        %v1995 = vld [vmem:[%s3 + $0x80] sm:$0xf]
        %v1996 = vld [vmem:[%s3 + $0x84] sm:$0xf]
        %v1997 = vld [vmem:[%s3 + $0x88] sm:$0xf]
        %v1998 = vld [vmem:[%s3 + $0x8c] sm:$0xf]
        %v1999 = vld [vmem:[%s3 + $0x90] sm:$0xf]
        %v2000 = vld [vmem:[%s3 + $0x94] sm:$0xf]
        %v2001 = vld [vmem:[%s3 + $0x98] sm:$0xf]
        %v2002 = vld [vmem:[%s3 + $0x9c] sm:$0xf]
        %v2003 = vld [vmem:[%s3 + $0xa0] sm:$0xf]
        %v2004 = vld [vmem:[%s3 + $0xa4] sm:$0xf]
        %v2005 = vld [vmem:[%s3 + $0xa8] sm:$0xf]
        %v2006 = vld [vmem:[%s3 + $0xac] sm:$0xf]
        %v2007 = vld [vmem:[%s3 + $0xb0] sm:$0xf]
        %v2008 = vld [vmem:[%s3 + $0xb4] sm:$0xf]
        %v2009 = vld [vmem:[%s3 + $0xb8] sm:$0xf]
        %v2010 = vld [vmem:[%s3 + $0xbc] sm:$0xf]
        %v2027 = vunpack.c.l.b16 %v1995
        %v2028 = vunpack.c.l.b16 %v1996
        %v2029 = vunpack.c.l.b16 %v1997
        %v2030 = vunpack.c.l.b16 %v1998
        %v2031 = vunpack.c.l.b16 %v1999
        %v2032 = vunpack.c.l.b16 %v2000
        %v2033 = vunpack.c.l.b16 %v2001
        %v2034 = vunpack.c.l.b16 %v2002
        %v2035 = vunpack.c.l.b16 %v2003
        %v2036 = vunpack.c.l.b16 %v2004
        %v2037 = vunpack.c.l.b16 %v2005
        %v2038 = vunpack.c.l.b16 %v2006
        %v2039 = vunpack.c.l.b16 %v2007
        %v2040 = vunpack.c.l.b16 %v2008
        %v2041 = vunpack.c.l.b16 %v2009
        %v2042 = vunpack.c.l.b16 %v2010
        %v2043 = vpack.c.b16 %v2028, %v2027
        %v2044 = vpack.c.b16 %v2030, %v2029
        %v2045 = vpack.c.b16 %v2032, %v2031
        %v2046 = vpack.c.b16 %v2034, %v2033
        %v2047 = vpack.c.b16 %v2036, %v2035
        %v2048 = vpack.c.b16 %v2038, %v2037
        %v2049 = vpack.c.b16 %v2040, %v2039
        %v2050 = vpack.c.b16 %v2042, %v2041
        %2059 = vmatprep.subr.bf16.mxu0 0
        %2060 = vmatpush1.bf16.msra.mxu0 %v2043
        %2061 = vmatprep.subr.bf16.mxu0 0
        %2062 = vmatpush1.bf16.msra.mxu0 %v2044
        %2063 = vmatprep.subr.bf16.mxu0 0
        %2064 = vmatpush1.bf16.msra.mxu0 %v2045
        %2065 = vmatprep.subr.bf16.mxu0 0
        %2066 = vmatpush1.bf16.msra.mxu0 %v2046
        %2067 = vmatprep.subr.bf16.mxu0 0
        %2068 = vmatpush1.bf16.msra.mxu0 %v2047
        %2069 = vmatprep.subr.bf16.mxu0 0
        %2070 = vmatpush1.bf16.msra.mxu0 %v2048
        %2071 = vmatprep.subr.bf16.mxu0 0
        %2072 = vmatpush1.bf16.msra.mxu0 %v2049
        %2073 = vmatprep.subr.bf16.mxu0 0
        %2074 = vmatpush1.bf16.msra.mxu0 %v2050
        %2075 = vmatprep.subr.bf16.mxu0 0
        %2076 = vmatpush1.bf16.msra.mxu0 0
        %2077 = vmatprep.subr.bf16.mxu0 0
        %2078 = vmatpush1.bf16.msra.mxu0 0
        %2079 = vmatprep.subr.bf16.mxu0 0
        %2080 = vmatpush1.bf16.msra.mxu0 0
        %2081 = vmatprep.subr.bf16.mxu0 0
        %2082 = vmatpush1.bf16.msra.mxu0 0
        %2083 = vmatprep.subr.bf16.mxu0 0
        %2084 = vmatpush1.bf16.msra.mxu0 0
        %2085 = vmatprep.subr.bf16.mxu0 0
        %2086 = vmatpush1.bf16.msra.mxu0 0
        %2087 = vmatprep.subr.bf16.mxu0 0
        %2088 = vmatpush1.bf16.msra.mxu0 0
        %2089 = vmatprep.subr.bf16.mxu0 0
        %2090 = vmatpush1.bf16.msra.mxu0 0
        %2091 = vmatprep.mubr.bf16.mxu0 0
        %2092 = vmatmul.mubr.bf16.gmra.mrb[0].mxu0 %v1994
        %v2093 = vpop.f32.mrb[0].mxu0
        %v2094 = vadd.f32 0.0, %v2093
        %v2095 = vpop.f32.mrb[0].mxu0
        %v2096 = vpop.f32.mrb[0].mxu0
        %v2097 = vpop.f32.mrb[0].mxu0
        %2098 = vdwg.mxu0
        %v2099 = vadd.f32 %v1478, %v2094
        %v2100 = vld [vmem:[#allocation2 + $0xc] sm:$0xf]
        %v2101 = vld [vmem:[#allocation2 + $0x1c] sm:$0xf]
        %v2102 = vld [vmem:[#allocation2 + $0x2c] sm:$0xf]
        %v2103 = vld [vmem:[#allocation2 + $0x3c] sm:$0xf]
        %v2104 = vld [vmem:[#allocation2 + $0x4c] sm:$0xf]
        %v2105 = vld [vmem:[#allocation2 + $0x5c] sm:$0xf]
        %v2106 = vld [vmem:[#allocation2 + $0x6c] sm:$0xf]
        %v2107 = vld [vmem:[#allocation2 + $0x7c] sm:$0xf]
        %v2108 = vld [vmem:[#allocation2 + $0x8c] sm:$0xf]
        %v2109 = vld [vmem:[#allocation2 + $0x9c] sm:$0xf]
        %v2110 = vld [vmem:[#allocation2 + $0xac] sm:$0xf]
        %v2111 = vld [vmem:[#allocation2 + $0xbc] sm:$0xf]
        %v2112 = vld [vmem:[#allocation2 + $0xcc] sm:$0xf]
        %v2113 = vld [vmem:[#allocation2 + $0xdc] sm:$0xf]
        %v2114 = vld [vmem:[#allocation2 + $0xec] sm:$0xf]
        %v2115 = vld [vmem:[#allocation2 + $0xfc] sm:$0xf]
        %v2116 = vld [vmem:[#allocation2 + $0x10c] sm:$0xf]
        %v2117 = vld [vmem:[#allocation2 + $0x11c] sm:$0xf]
        %v2118 = vld [vmem:[#allocation2 + $0x12c] sm:$0xf]
        %v2119 = vld [vmem:[#allocation2 + $0x13c] sm:$0xf]
        %v2120 = vld [vmem:[#allocation2 + $0x14c] sm:$0xf]
        %v2121 = vld [vmem:[#allocation2 + $0x15c] sm:$0xf]
        %v2122 = vld [vmem:[#allocation2 + $0x16c] sm:$0xf]
        %v2123 = vld [vmem:[#allocation2 + $0x17c] sm:$0xf]
        %v2124 = vld [vmem:[#allocation2 + $0x18c] sm:$0xf]
        %v2125 = vld [vmem:[#allocation2 + $0x19c] sm:$0xf]
        %v2126 = vld [vmem:[#allocation2 + $0x1ac] sm:$0xf]
        %v2127 = vld [vmem:[#allocation2 + $0x1bc] sm:$0xf]
        %v2128 = vld [vmem:[#allocation2 + $0x1cc] sm:$0xf]
        %v2129 = vld [vmem:[#allocation2 + $0x1dc] sm:$0xf]
        %v2130 = vld [vmem:[#allocation2 + $0x1ec] sm:$0xf]
        %v2131 = vld [vmem:[#allocation2 + $0x1fc] sm:$0xf]
        %v2132 = vld [vmem:[#allocation2 + $0x20c] sm:$0xf]
        %v2133 = vld [vmem:[#allocation2 + $0x21c] sm:$0xf]
        %v2134 = vld [vmem:[#allocation2 + $0x22c] sm:$0xf]
        %v2135 = vld [vmem:[#allocation2 + $0x23c] sm:$0xf]
        %v2136 = vld [vmem:[#allocation2 + $0x24c] sm:$0xf]
        %v2137 = vld [vmem:[#allocation2 + $0x25c] sm:$0xf]
        %v2138 = vld [vmem:[#allocation2 + $0x26c] sm:$0xf]
        %v2139 = vld [vmem:[#allocation2 + $0x27c] sm:$0xf]
        %v2140 = vld [vmem:[#allocation2 + $0x28c] sm:$0xf]
        %v2141 = vld [vmem:[#allocation2 + $0x29c] sm:$0xf]
        %v2142 = vld [vmem:[#allocation2 + $0x2ac] sm:$0xf]
        %v2143 = vld [vmem:[#allocation2 + $0x2bc] sm:$0xf]
        %v2144 = vld [vmem:[#allocation2 + $0x2cc] sm:$0xf]
        %v2145 = vld [vmem:[#allocation2 + $0x2dc] sm:$0xf]
        %v2146 = vld [vmem:[#allocation2 + $0x2ec] sm:$0xf]
        %v2147 = vld [vmem:[#allocation2 + $0x2fc] sm:$0xf]
        %v2148 = vld [vmem:[#allocation2 + $0x30c] sm:$0xf]
        %v2149 = vld [vmem:[#allocation2 + $0x31c] sm:$0xf]
        %v2150 = vld [vmem:[#allocation2 + $0x32c] sm:$0xf]
        %v2151 = vld [vmem:[#allocation2 + $0x33c] sm:$0xf]
        %v2152 = vld [vmem:[#allocation2 + $0x34c] sm:$0xf]
        %v2153 = vld [vmem:[#allocation2 + $0x35c] sm:$0xf]
        %v2154 = vld [vmem:[#allocation2 + $0x36c] sm:$0xf]
        %v2155 = vld [vmem:[#allocation2 + $0x37c] sm:$0xf]
        %v2156 = vld [vmem:[#allocation2 + $0x38c] sm:$0xf]
        %v2157 = vld [vmem:[#allocation2 + $0x39c] sm:$0xf]
        %v2158 = vld [vmem:[#allocation2 + $0x3ac] sm:$0xf]
        %v2159 = vld [vmem:[#allocation2 + $0x3bc] sm:$0xf]
        %v2160 = vld [vmem:[#allocation2 + $0x3cc] sm:$0xf]
        %v2161 = vld [vmem:[#allocation2 + $0x3dc] sm:$0xf]
        %v2162 = vld [vmem:[#allocation2 + $0x3ec] sm:$0xf]
        %v2163 = vld [vmem:[#allocation2 + $0x3fc] sm:$0xf]
        %v2164 = vld [vmem:[#allocation2 + $0x40c] sm:$0xf]
        %v2165 = vld [vmem:[#allocation2 + $0x41c] sm:$0xf]
        %v2166 = vld [vmem:[#allocation2 + $0x42c] sm:$0xf]
        %v2167 = vld [vmem:[#allocation2 + $0x43c] sm:$0xf]
        %v2168 = vld [vmem:[#allocation2 + $0x44c] sm:$0xf]
        %v2169 = vld [vmem:[#allocation2 + $0x45c] sm:$0xf]
        %v2170 = vld [vmem:[#allocation2 + $0x46c] sm:$0xf]
        %v2171 = vld [vmem:[#allocation2 + $0x47c] sm:$0xf]
        %v2172 = vld [vmem:[#allocation2 + $0x48c] sm:$0xf]
        %v2173 = vld [vmem:[#allocation2 + $0x49c] sm:$0xf]
        %v2174 = vld [vmem:[#allocation2 + $0x4ac] sm:$0xf]
        %v2175 = vld [vmem:[#allocation2 + $0x4bc] sm:$0xf]
        %v2176 = vld [vmem:[#allocation2 + $0x4cc] sm:$0xf]
        %v2177 = vld [vmem:[#allocation2 + $0x4dc] sm:$0xf]
        %v2178 = vld [vmem:[#allocation2 + $0x4ec] sm:$0xf]
        %v2179 = vld [vmem:[#allocation2 + $0x4fc] sm:$0xf]
        %v2180 = vld [vmem:[#allocation2 + $0x50c] sm:$0xf]
        %v2181 = vld [vmem:[#allocation2 + $0x51c] sm:$0xf]
        %v2182 = vld [vmem:[#allocation2 + $0x52c] sm:$0xf]
        %v2183 = vld [vmem:[#allocation2 + $0x53c] sm:$0xf]
        %v2184 = vld [vmem:[#allocation2 + $0x54c] sm:$0xf]
        %v2185 = vld [vmem:[#allocation2 + $0x55c] sm:$0xf]
        %v2186 = vld [vmem:[#allocation2 + $0x56c] sm:$0xf]
        %v2187 = vld [vmem:[#allocation2 + $0x57c] sm:$0xf]
        %v2188 = vld [vmem:[#allocation2 + $0x58c] sm:$0xf]
        %v2189 = vld [vmem:[#allocation2 + $0x59c] sm:$0xf]
        %v2190 = vld [vmem:[#allocation2 + $0x5ac] sm:$0xf]
        %v2191 = vld [vmem:[#allocation2 + $0x5bc] sm:$0xf]
        %v2192 = vld [vmem:[#allocation2 + $0x5cc] sm:$0xf]
        %v2193 = vld [vmem:[#allocation2 + $0x5dc] sm:$0xf]
        %v2194 = vld [vmem:[#allocation2 + $0x5ec] sm:$0xf]
        %v2195 = vld [vmem:[#allocation2 + $0x5fc] sm:$0xf]
        %v2196 = vld [vmem:[%s2 + $0x3] sm:$0x1]
        %v2198 = vlaneseq
        %v2199 = vshrl.u32 %v2198, 7
        %v2200 = vsub.s32 0, %v2199
        %v2201 = vrot.slane %v2196, %v2200
        %v2299 = vunpack.c.l.b16 %v2100
        %v2300 = vunpack.c.l.b16 %v2101
        %v2301 = vunpack.c.l.b16 %v2102
        %v2302 = vunpack.c.l.b16 %v2103
        %v2303 = vunpack.c.l.b16 %v2104
        %v2304 = vunpack.c.l.b16 %v2105
        %v2305 = vunpack.c.l.b16 %v2106
        %v2306 = vunpack.c.l.b16 %v2107
        %v2307 = vunpack.c.l.b16 %v2108
        %v2308 = vunpack.c.l.b16 %v2109
        %v2309 = vunpack.c.l.b16 %v2110
        %v2310 = vunpack.c.l.b16 %v2111
        %v2311 = vunpack.c.l.b16 %v2112
        %v2312 = vunpack.c.l.b16 %v2113
        %v2313 = vunpack.c.l.b16 %v2114
        %v2314 = vunpack.c.l.b16 %v2115
        %v2315 = vunpack.c.l.b16 %v2116
        %v2316 = vunpack.c.l.b16 %v2117
        %v2317 = vunpack.c.l.b16 %v2118
        %v2318 = vunpack.c.l.b16 %v2119
        %v2319 = vunpack.c.l.b16 %v2120
        %v2320 = vunpack.c.l.b16 %v2121
        %v2321 = vunpack.c.l.b16 %v2122
        %v2322 = vunpack.c.l.b16 %v2123
        %v2323 = vunpack.c.l.b16 %v2124
        %v2324 = vunpack.c.l.b16 %v2125
        %v2325 = vunpack.c.l.b16 %v2126
        %v2326 = vunpack.c.l.b16 %v2127
        %v2327 = vunpack.c.l.b16 %v2128
        %v2328 = vunpack.c.l.b16 %v2129
        %v2329 = vunpack.c.l.b16 %v2130
        %v2330 = vunpack.c.l.b16 %v2131
        %v2331 = vunpack.c.l.b16 %v2132
        %v2332 = vunpack.c.l.b16 %v2133
        %v2333 = vunpack.c.l.b16 %v2134
        %v2334 = vunpack.c.l.b16 %v2135
        %v2335 = vunpack.c.l.b16 %v2136
        %v2336 = vunpack.c.l.b16 %v2137
        %v2337 = vunpack.c.l.b16 %v2138
        %v2338 = vunpack.c.l.b16 %v2139
        %v2339 = vunpack.c.l.b16 %v2140
        %v2340 = vunpack.c.l.b16 %v2141
        %v2341 = vunpack.c.l.b16 %v2142
        %v2342 = vunpack.c.l.b16 %v2143
        %v2343 = vunpack.c.l.b16 %v2144
        %v2344 = vunpack.c.l.b16 %v2145
        %v2345 = vunpack.c.l.b16 %v2146
        %v2346 = vunpack.c.l.b16 %v2147
        %v2347 = vunpack.c.l.b16 %v2148
        %v2348 = vunpack.c.l.b16 %v2149
        %v2349 = vunpack.c.l.b16 %v2150
        %v2350 = vunpack.c.l.b16 %v2151
        %v2351 = vunpack.c.l.b16 %v2152
        %v2352 = vunpack.c.l.b16 %v2153
        %v2353 = vunpack.c.l.b16 %v2154
        %v2354 = vunpack.c.l.b16 %v2155
        %v2355 = vunpack.c.l.b16 %v2156
        %v2356 = vunpack.c.l.b16 %v2157
        %v2357 = vunpack.c.l.b16 %v2158
        %v2358 = vunpack.c.l.b16 %v2159
        %v2359 = vunpack.c.l.b16 %v2160
        %v2360 = vunpack.c.l.b16 %v2161
        %v2361 = vunpack.c.l.b16 %v2162
        %v2362 = vunpack.c.l.b16 %v2163
        %v2363 = vunpack.c.l.b16 %v2164
        %v2364 = vunpack.c.l.b16 %v2165
        %v2365 = vunpack.c.l.b16 %v2166
        %v2366 = vunpack.c.l.b16 %v2167
        %v2367 = vunpack.c.l.b16 %v2168
        %v2368 = vunpack.c.l.b16 %v2169
        %v2369 = vunpack.c.l.b16 %v2170
        %v2370 = vunpack.c.l.b16 %v2171
        %v2371 = vunpack.c.l.b16 %v2172
        %v2372 = vunpack.c.l.b16 %v2173
        %v2373 = vunpack.c.l.b16 %v2174
        %v2374 = vunpack.c.l.b16 %v2175
        %v2375 = vunpack.c.l.b16 %v2176
        %v2376 = vunpack.c.l.b16 %v2177
        %v2377 = vunpack.c.l.b16 %v2178
        %v2378 = vunpack.c.l.b16 %v2179
        %v2379 = vunpack.c.l.b16 %v2180
        %v2380 = vunpack.c.l.b16 %v2181
        %v2381 = vunpack.c.l.b16 %v2182
        %v2382 = vunpack.c.l.b16 %v2183
        %v2383 = vunpack.c.l.b16 %v2184
        %v2384 = vunpack.c.l.b16 %v2185
        %v2385 = vunpack.c.l.b16 %v2186
        %v2386 = vunpack.c.l.b16 %v2187
        %v2387 = vunpack.c.l.b16 %v2188
        %v2388 = vunpack.c.l.b16 %v2189
        %v2389 = vunpack.c.l.b16 %v2190
        %v2390 = vunpack.c.l.b16 %v2191
        %v2391 = vunpack.c.l.b16 %v2192
        %v2392 = vunpack.c.l.b16 %v2193
        %v2393 = vunpack.c.l.b16 %v2194
        %v2394 = vunpack.c.l.b16 %v2195
        %v2395 = vpack.c.b16 %v2300, %v2299
        %v2396 = vpack.c.b16 %v2302, %v2301
        %v2397 = vpack.c.b16 %v2304, %v2303
        %v2398 = vpack.c.b16 %v2306, %v2305
        %v2399 = vpack.c.b16 %v2308, %v2307
        %v2400 = vpack.c.b16 %v2310, %v2309
        %v2401 = vpack.c.b16 %v2312, %v2311
        %v2402 = vpack.c.b16 %v2314, %v2313
        %v2403 = vpack.c.b16 %v2316, %v2315
        %v2404 = vpack.c.b16 %v2318, %v2317
        %v2405 = vpack.c.b16 %v2320, %v2319
        %v2406 = vpack.c.b16 %v2322, %v2321
        %v2407 = vpack.c.b16 %v2324, %v2323
        %v2408 = vpack.c.b16 %v2326, %v2325
        %v2409 = vpack.c.b16 %v2328, %v2327
        %v2410 = vpack.c.b16 %v2330, %v2329
        %v2411 = vpack.c.b16 %v2332, %v2331
        %v2412 = vpack.c.b16 %v2334, %v2333
        %v2413 = vpack.c.b16 %v2336, %v2335
        %v2414 = vpack.c.b16 %v2338, %v2337
        %v2415 = vpack.c.b16 %v2340, %v2339
        %v2416 = vpack.c.b16 %v2342, %v2341
        %v2417 = vpack.c.b16 %v2344, %v2343
        %v2418 = vpack.c.b16 %v2346, %v2345
        %v2419 = vpack.c.b16 %v2348, %v2347
        %v2420 = vpack.c.b16 %v2350, %v2349
        %v2421 = vpack.c.b16 %v2352, %v2351
        %v2422 = vpack.c.b16 %v2354, %v2353
        %v2423 = vpack.c.b16 %v2356, %v2355
        %v2424 = vpack.c.b16 %v2358, %v2357
        %v2425 = vpack.c.b16 %v2360, %v2359
        %v2426 = vpack.c.b16 %v2362, %v2361
        %v2427 = vpack.c.b16 %v2364, %v2363
        %v2428 = vpack.c.b16 %v2366, %v2365
        %v2429 = vpack.c.b16 %v2368, %v2367
        %v2430 = vpack.c.b16 %v2370, %v2369
        %v2431 = vpack.c.b16 %v2372, %v2371
        %v2432 = vpack.c.b16 %v2374, %v2373
        %v2433 = vpack.c.b16 %v2376, %v2375
        %v2434 = vpack.c.b16 %v2378, %v2377
        %v2435 = vpack.c.b16 %v2380, %v2379
        %v2436 = vpack.c.b16 %v2382, %v2381
        %v2437 = vpack.c.b16 %v2384, %v2383
        %v2438 = vpack.c.b16 %v2386, %v2385
        %v2439 = vpack.c.b16 %v2388, %v2387
        %v2440 = vpack.c.b16 %v2390, %v2389
        %v2441 = vpack.c.b16 %v2392, %v2391
        %v2442 = vpack.c.b16 %v2394, %v2393
        %2491 = vmatprep.subr.bf16.mxu0 0
        %2492 = vmatpush1.bf16.msra.mxu0 %v2395
        %2493 = vmatprep.subr.bf16.mxu0 0
        %2494 = vmatpush1.bf16.msra.mxu0 %v2396
        %2495 = vmatprep.subr.bf16.mxu0 0
        %2496 = vmatpush1.bf16.msra.mxu0 %v2397
        %2497 = vmatprep.subr.bf16.mxu0 0
        %2498 = vmatpush1.bf16.msra.mxu0 %v2398
        %2499 = vmatprep.subr.bf16.mxu0 0
        %2500 = vmatpush1.bf16.msra.mxu0 %v2399
        %2501 = vmatprep.subr.bf16.mxu0 0
        %2502 = vmatpush1.bf16.msra.mxu0 %v2400
        %2503 = vmatprep.subr.bf16.mxu0 0
        %2504 = vmatpush1.bf16.msra.mxu0 %v2401
        %2505 = vmatprep.subr.bf16.mxu0 0
        %2506 = vmatpush1.bf16.msra.mxu0 %v2402
        %2507 = vmatprep.subr.bf16.mxu0 0
        %2508 = vmatpush1.bf16.msra.mxu0 %v2403
        %2509 = vmatprep.subr.bf16.mxu0 0
        %2510 = vmatpush1.bf16.msra.mxu0 %v2404
        %2511 = vmatprep.subr.bf16.mxu0 0
        %2512 = vmatpush1.bf16.msra.mxu0 %v2405
        %2513 = vmatprep.subr.bf16.mxu0 0
        %2514 = vmatpush1.bf16.msra.mxu0 %v2406
        %2515 = vmatprep.subr.bf16.mxu0 0
        %2516 = vmatpush1.bf16.msra.mxu0 %v2407
        %2517 = vmatprep.subr.bf16.mxu0 0
        %2518 = vmatpush1.bf16.msra.mxu0 %v2408
        %2519 = vmatprep.subr.bf16.mxu0 0
        %2520 = vmatpush1.bf16.msra.mxu0 %v2409
        %2521 = vmatprep.subr.bf16.mxu0 0
        %2522 = vmatpush1.bf16.msra.mxu0 %v2410
        %2523 = vmatprep.mubr.bf16.mxu0 %v246
        %2524 = vmatmul.mubr.bf16.gmra.mrb[0].mxu0 %v245
        %v2525 = vpop.f32.mrb[0].mxu0
        %v2526 = vadd.f32 %v2201, %v2525
        %v2527 = vpop.f32.mrb[0].mxu0
        %v2528 = vpop.f32.mrb[0].mxu0
        %v2529 = vpop.f32.mrb[0].mxu0
        %2530 = vdwg.mxu0
        %2531 = vmatprep.subr.bf16.mxu0 0
        %2532 = vmatpush1.bf16.msra.mxu0 %v2411
        %2533 = vmatprep.subr.bf16.mxu0 0
        %2534 = vmatpush1.bf16.msra.mxu0 %v2412
        %2535 = vmatprep.subr.bf16.mxu0 0
        %2536 = vmatpush1.bf16.msra.mxu0 %v2413
        %2537 = vmatprep.subr.bf16.mxu0 0
        %2538 = vmatpush1.bf16.msra.mxu0 %v2414
        %2539 = vmatprep.subr.bf16.mxu0 0
        %2540 = vmatpush1.bf16.msra.mxu0 %v2415
        %2541 = vmatprep.subr.bf16.mxu0 0
        %2542 = vmatpush1.bf16.msra.mxu0 %v2416
        %2543 = vmatprep.subr.bf16.mxu0 0
        %2544 = vmatpush1.bf16.msra.mxu0 %v2417
        %2545 = vmatprep.subr.bf16.mxu0 0
        %2546 = vmatpush1.bf16.msra.mxu0 %v2418
        %2547 = vmatprep.subr.bf16.mxu0 0
        %2548 = vmatpush1.bf16.msra.mxu0 %v2419
        %2549 = vmatprep.subr.bf16.mxu0 0
        %2550 = vmatpush1.bf16.msra.mxu0 %v2420
        %2551 = vmatprep.subr.bf16.mxu0 0
        %2552 = vmatpush1.bf16.msra.mxu0 %v2421
        %2553 = vmatprep.subr.bf16.mxu0 0
        %2554 = vmatpush1.bf16.msra.mxu0 %v2422
        %2555 = vmatprep.subr.bf16.mxu0 0
        %2556 = vmatpush1.bf16.msra.mxu0 %v2423
        %2557 = vmatprep.subr.bf16.mxu0 0
        %2558 = vmatpush1.bf16.msra.mxu0 %v2424
        %2559 = vmatprep.subr.bf16.mxu0 0
        %2560 = vmatpush1.bf16.msra.mxu0 %v2425
        %2561 = vmatprep.subr.bf16.mxu0 0
        %2562 = vmatpush1.bf16.msra.mxu0 %v2426
        %2563 = vmatprep.mubr.bf16.mxu0 %v248
        %2564 = vmatmul.mubr.bf16.gmra.mrb[0].mxu0 %v247
        %v2565 = vpop.f32.mrb[0].mxu0
        %v2566 = vadd.f32 %v2526, %v2565
        %v2567 = vpop.f32.mrb[0].mxu0
        %v2568 = vpop.f32.mrb[0].mxu0
        %v2569 = vpop.f32.mrb[0].mxu0
        %2570 = vdwg.mxu0
        %2571 = vmatprep.subr.bf16.mxu0 0
        %2572 = vmatpush1.bf16.msra.mxu0 %v2427
        %2573 = vmatprep.subr.bf16.mxu0 0
        %2574 = vmatpush1.bf16.msra.mxu0 %v2428
        %2575 = vmatprep.subr.bf16.mxu0 0
        %2576 = vmatpush1.bf16.msra.mxu0 %v2429
        %2577 = vmatprep.subr.bf16.mxu0 0
        %2578 = vmatpush1.bf16.msra.mxu0 %v2430
        %2579 = vmatprep.subr.bf16.mxu0 0
        %2580 = vmatpush1.bf16.msra.mxu0 %v2431
        %2581 = vmatprep.subr.bf16.mxu0 0
        %2582 = vmatpush1.bf16.msra.mxu0 %v2432
        %2583 = vmatprep.subr.bf16.mxu0 0
        %2584 = vmatpush1.bf16.msra.mxu0 %v2433
        %2585 = vmatprep.subr.bf16.mxu0 0
        %2586 = vmatpush1.bf16.msra.mxu0 %v2434
        %2587 = vmatprep.subr.bf16.mxu0 0
        %2588 = vmatpush1.bf16.msra.mxu0 %v2435
        %2589 = vmatprep.subr.bf16.mxu0 0
        %2590 = vmatpush1.bf16.msra.mxu0 %v2436
        %2591 = vmatprep.subr.bf16.mxu0 0
        %2592 = vmatpush1.bf16.msra.mxu0 %v2437
        %2593 = vmatprep.subr.bf16.mxu0 0
        %2594 = vmatpush1.bf16.msra.mxu0 %v2438
        %2595 = vmatprep.subr.bf16.mxu0 0
        %2596 = vmatpush1.bf16.msra.mxu0 %v2439
        %2597 = vmatprep.subr.bf16.mxu0 0
        %2598 = vmatpush1.bf16.msra.mxu0 %v2440
        %2599 = vmatprep.subr.bf16.mxu0 0
        %2600 = vmatpush1.bf16.msra.mxu0 %v2441
        %2601 = vmatprep.subr.bf16.mxu0 0
        %2602 = vmatpush1.bf16.msra.mxu0 %v2442
        %2603 = vmatprep.mubr.bf16.mxu0 %v250
        %2604 = vmatmul.mubr.bf16.gmra.mrb[0].mxu0 %v249
        %v2605 = vpop.f32.mrb[0].mxu0
        %v2606 = vadd.f32 %v2566, %v2605
        %v2607 = vpop.f32.mrb[0].mxu0
        %v2608 = vpop.f32.mrb[0].mxu0
        %v2609 = vpop.f32.mrb[0].mxu0
        %2610 = vdwg.mxu0
        %v2611 = vpack.c.bf16 %v2606, %v2606
        %v2612 = vld [vmem:[%s3 + $0xc0] sm:$0xf]
        %v2613 = vld [vmem:[%s3 + $0xc4] sm:$0xf]
        %v2614 = vld [vmem:[%s3 + $0xc8] sm:$0xf]
        %v2615 = vld [vmem:[%s3 + $0xcc] sm:$0xf]
        %v2616 = vld [vmem:[%s3 + $0xd0] sm:$0xf]
        %v2617 = vld [vmem:[%s3 + $0xd4] sm:$0xf]
        %v2618 = vld [vmem:[%s3 + $0xd8] sm:$0xf]
        %v2619 = vld [vmem:[%s3 + $0xdc] sm:$0xf]
        %v2620 = vld [vmem:[%s3 + $0xe0] sm:$0xf]
        %v2621 = vld [vmem:[%s3 + $0xe4] sm:$0xf]
        %v2622 = vld [vmem:[%s3 + $0xe8] sm:$0xf]
        %v2623 = vld [vmem:[%s3 + $0xec] sm:$0xf]
        %v2624 = vld [vmem:[%s3 + $0xf0] sm:$0xf]
        %v2625 = vld [vmem:[%s3 + $0xf4] sm:$0xf]
        %v2626 = vld [vmem:[%s3 + $0xf8] sm:$0xf]
        %v2627 = vld [vmem:[%s3 + $0xfc] sm:$0xf]
        %v2644 = vunpack.c.l.b16 %v2612
        %v2645 = vunpack.c.l.b16 %v2613
        %v2646 = vunpack.c.l.b16 %v2614
        %v2647 = vunpack.c.l.b16 %v2615
        %v2648 = vunpack.c.l.b16 %v2616
        %v2649 = vunpack.c.l.b16 %v2617
        %v2650 = vunpack.c.l.b16 %v2618
        %v2651 = vunpack.c.l.b16 %v2619
        %v2652 = vunpack.c.l.b16 %v2620
        %v2653 = vunpack.c.l.b16 %v2621
        %v2654 = vunpack.c.l.b16 %v2622
        %v2655 = vunpack.c.l.b16 %v2623
        %v2656 = vunpack.c.l.b16 %v2624
        %v2657 = vunpack.c.l.b16 %v2625
        %v2658 = vunpack.c.l.b16 %v2626
        %v2659 = vunpack.c.l.b16 %v2627
        %v2660 = vpack.c.b16 %v2645, %v2644
        %v2661 = vpack.c.b16 %v2647, %v2646
        %v2662 = vpack.c.b16 %v2649, %v2648
        %v2663 = vpack.c.b16 %v2651, %v2650
        %v2664 = vpack.c.b16 %v2653, %v2652
        %v2665 = vpack.c.b16 %v2655, %v2654
        %v2666 = vpack.c.b16 %v2657, %v2656
        %v2667 = vpack.c.b16 %v2659, %v2658
        %2676 = vmatprep.subr.bf16.mxu0 0
        %2677 = vmatpush1.bf16.msra.mxu0 %v2660
        %2678 = vmatprep.subr.bf16.mxu0 0
        %2679 = vmatpush1.bf16.msra.mxu0 %v2661
        %2680 = vmatprep.subr.bf16.mxu0 0
        %2681 = vmatpush1.bf16.msra.mxu0 %v2662
        %2682 = vmatprep.subr.bf16.mxu0 0
        %2683 = vmatpush1.bf16.msra.mxu0 %v2663
        %2684 = vmatprep.subr.bf16.mxu0 0
        %2685 = vmatpush1.bf16.msra.mxu0 %v2664
        %2686 = vmatprep.subr.bf16.mxu0 0
        %2687 = vmatpush1.bf16.msra.mxu0 %v2665
        %2688 = vmatprep.subr.bf16.mxu0 0
        %2689 = vmatpush1.bf16.msra.mxu0 %v2666
        %2690 = vmatprep.subr.bf16.mxu0 0
        %2691 = vmatpush1.bf16.msra.mxu0 %v2667
        %2692 = vmatprep.subr.bf16.mxu0 0
        %2693 = vmatpush1.bf16.msra.mxu0 0
        %2694 = vmatprep.subr.bf16.mxu0 0
        %2695 = vmatpush1.bf16.msra.mxu0 0
        %2696 = vmatprep.subr.bf16.mxu0 0
        %2697 = vmatpush1.bf16.msra.mxu0 0
        %2698 = vmatprep.subr.bf16.mxu0 0
        %2699 = vmatpush1.bf16.msra.mxu0 0
        %2700 = vmatprep.subr.bf16.mxu0 0
        %2701 = vmatpush1.bf16.msra.mxu0 0
        %2702 = vmatprep.subr.bf16.mxu0 0
        %2703 = vmatpush1.bf16.msra.mxu0 0
        %2704 = vmatprep.subr.bf16.mxu0 0
        %2705 = vmatpush1.bf16.msra.mxu0 0
        %2706 = vmatprep.subr.bf16.mxu0 0
        %2707 = vmatpush1.bf16.msra.mxu0 0
        %2708 = vmatprep.mubr.bf16.mxu0 0
        %2709 = vmatmul.mubr.bf16.gmra.mrb[0].mxu0 %v2611
        %v2710 = vpop.f32.mrb[0].mxu0
        %v2711 = vadd.f32 0.0, %v2710
        %v2712 = vpop.f32.mrb[0].mxu0
        %v2713 = vpop.f32.mrb[0].mxu0
        %v2714 = vpop.f32.mrb[0].mxu0
        %2715 = vdwg.mxu0
        %v2716 = vadd.f32 %v2099, %v2711
        %v2717 = vld [vmem:[%s4] sm:$0x1]
        %v2719 = vlaneseq
        %v2720 = vshrl.u32 %v2719, 7
        %v2721 = vsub.s32 0, %v2720
        %v2722 = vrot.slane %v2717, %v2721
        %v2724 = vadd.f32 %v2716, %v2722
        %vm2725 = vcmask 261120
        %2726 = vst.msk [vmem:[%s237] sm:$0xff] %vm2725, %v2724
        %p2727 = scmp.lt.s32.totalorder %s17, 1
        %s2728 = scalar_select %p2727, %s17, 1
        %s2729 = smul.addr %s2728, 8
        %s2730 = scalar_lea.vmem %s5, %s2729
        // Predicated region
        $region45: #{model_forward.1} parent=39 // pred_check
          %p2731 = pneg %p145
        $region46: #{model_forward.1} parent=39 // pred_check_branch
          %2733 = sbr.rel (%p2731) target = $region48
        $region47: #{model_forward.1} parent=39 // pred_region
          _
        $region48: #{model_forward.1} parent=39 // pred_fallthru
          _
      $region40: #{model_forward.1} parent=5 // pred_fallthru
        _
      %p2734 = scmp.le.s32.totalorder 2, %s12
      // Predicated region
      $region49: #{model_forward.1} parent=5 // pred_check
        %p2735 = pneg %p2734
      $region50: #{model_forward.1} parent=5 // pred_check_branch
        %2737 = sbr.rel (%p2735) target = $region52
      $region51: #{model_forward.1} parent=5 // pred_region
        %s2738 = ssub.s32 %s12, 2
        // Predicated region
        $region53: #{model_forward.1} parent=51 // pred_check
          %p2739 = pneg %p151
        $region54: #{model_forward.1} parent=51 // pred_check_branch
          %2741 = sbr.rel (%p2739) target = $region56
        $region55: #{model_forward.1} parent=51 // pred_region
          %p2742 = scmp.lt.s32.totalorder %s18, 1
          %s2743 = scalar_select %p2742, %s18, 1
          %s2744 = smul.addr %s2743, 8
          %s2745 = scalar_lea.vmem %s5, %s2744
        $region56: #{model_forward.1} parent=51 // pred_fallthru
          _
      $region52: #{model_forward.1} parent=5 // pred_fallthru
        _
    $region6: #{model_forward.1} parent=1 // loop_footer
      %s16 = sadd.s32 1, %s12
    $region7: #{model_forward.1} parent=1 // loop_footer_branch
      %11 = sbr.rel target = $region3
    $region8: #{model_forward.1} parent=1 // loop_exit
      _
    %2746 = vsyncpa [#allocation3], 1
    %s2747 = scalar_lea.sflag [#allocation3], 1
    %2748 = vsyncpa %s2747, 1

</llo_original>
